<compile_context>
chip_gen: v6e
topology: v6e:2x2x1
jax: 0.10.0
libtpu: 0.0.40
codegen_flags: <defaults>
</compile_context>

<pallas_src>
import functools

import jax
import jax.numpy as jnp
from jax import lax
from jax.experimental import pallas as pl
from jax.experimental.pallas import tpu as pltpu


# ----------------------------- Pallas kernel -----------------------------

def _layernorm(x2d, g, b, eps=1e-5):
    mu = jnp.mean(x2d, axis=-1, keepdims=True)
    var = jnp.mean((x2d - mu) ** 2, axis=-1, keepdims=True)
    return (x2d - mu) * lax.rsqrt(var + eps) * g + b


def transformer_kernel(x_ref, vec_ref, wqkv_ref, wo_ref, w1_ref, b1m_ref, w2_ref,
                       o_ref, xc_ref, h2_ref, *, num_heads, B, S, E):
    layer = pl.program_id(0)
    fidx = pl.program_id(1)
    H = num_heads
    Dh = E // H

    # Layer 0: one DMA of the input (left in HBM via memory_space=ANY) into the f32 VMEM carry.
    @pl.when((layer == 0) & (fidx == 0))
    def _():
        pltpu.sync_copy(x_ref, xc_ref)

    # ---- per-layer prologue (runs once per layer): attention (batch 0 only) + LayerNorm2 ----
    @pl.when(fidx == 0)
    def _():
        vec = vec_ref[...]                                  # (8, 3E) f32 packed vector params
        g1, b1 = vec[0:1, :E], vec[1:2, :E]
        g2, b2 = vec[2:3, :E], vec[3:4, :E]
        bo, b2m = vec[4:5, :E], vec[5:6, :E]
        bqkv = vec[6:7, :]                                  # (1, 3E)

        x2 = xc_ref[...]                                    # (B*S, E) f32 residual carry

        # reference quirk `x + mha(norm1(x))[0]`: only batch 0's attention output is used.
        h0 = _layernorm(x2[:S, :], g1, b1).astype(jnp.bfloat16)          # (S, E)
        qkv = jnp.dot(h0, wqkv_ref[...],
                      preferred_element_type=jnp.float32) + bqkv         # (S, 3E); 1/sqrt(Dh) folded into q
        qkv = qkv.astype(jnp.bfloat16)
        wo_b = wo_ref[...]                                               # (E, E) bf16

        # Heads via static lane slices + A@B^T dot_generals: no runtime transposes / relayouts.
        # Output projection folded per head -> no concatenation of head outputs.
        proj0 = bo                                                       # (1, E), broadcasts to (S, E)
        for h in range(H):                                               # statically unrolled
            q_h = qkv[:, h * Dh:(h + 1) * Dh]                            # (S, Dh), pre-scaled
            k_h = qkv[:, E + h * Dh:E + (h + 1) * Dh]                    # (S, Dh)
            v_h = qkv[:, 2 * E + h * Dh:2 * E + (h + 1) * Dh]            # (S, Dh)
            s = lax.dot_general(q_h, k_h, (((1,), (1,)), ((), ())),
                                preferred_element_type=jnp.float32)      # (S, S) = q @ k^T
            s = s - jnp.max(s, axis=-1, keepdims=True)
            p = jnp.exp(s)
            p = p / jnp.sum(p, axis=-1, keepdims=True)                   # exact softmax denom
            o_h = jnp.dot(p.astype(jnp.bfloat16), v_h,
                          preferred_element_type=jnp.float32)            # (S, Dh)
            proj0 = proj0 + jnp.dot(o_h.astype(jnp.bfloat16),
                                    wo_b[h * Dh:(h + 1) * Dh, :],
                                    preferred_element_type=jnp.float32)  # (S, E)

        x2 = (x2.reshape(B, S, E) + proj0.reshape(1, S, E)).reshape(B * S, E)

        # LN2 activations are reused by every FFN chunk of this layer; fc2 bias folded in once.
        h2_ref[...] = _layernorm(x2, g2, b2).astype(jnp.bfloat16)
        xc_ref[...] = x2 + b2m

    # ---- fused fc1 -> ReLU -> fc2 over one F-chunk, accumulated into the carry ----
    h2 = h2_ref[...]                                                     # (B*S, E) bf16
    m1 = jnp.maximum(jnp.dot(h2, w1_ref[...], preferred_element_type=jnp.float32)
                     + b1m_ref[...], 0.0)                                # (B*S, TF) f32, never stored
    xc_ref[...] += jnp.dot(m1.astype(jnp.bfloat16), w2_ref[...],
                           preferred_element_type=jnp.float32)           # (B*S, E)

    @pl.when((layer == pl.num_programs(0) - 1) & (fidx == pl.num_programs(1) - 1))
    def _():
        o_ref[...] = xc_ref[...].astype(o_ref.dtype)


# ----------------------------- JAX wrapper -----------------------------

def _pick_f_tile(F):
    """FFN-dim streaming chunk: largest of {512, 256, 128} that tiles F, else F itself."""
    for t in (512, 256, 128):
        if F % t == 0 and F > t:
            return t
    return F


def _vmem_limit_bytes(B, S, E, TF):
    bs = B * S
    weights = 2 * 2 * (E * 3 * E + E * E + E * TF + TF * E)   # double-buffered bf16 weight blocks
    vectors = 2 * 4 * (8 * 3 * E + TF)                        # packed f32 params + fc1-bias chunk
    resident = 4 * bs * E + 2 * bs * E + 2 * 4 * bs * E       # f32 carry + bf16 LN2 + output block
    interm = 4 * (S * S + bs * TF + 2 * bs * E)               # scores, fc1 chunk, headroom
    est = weights + vectors + resident + interm
    return min(128 * 1024 * 1024, max(32 * 1024 * 1024, 2 * est))


@functools.partial(jax.jit, static_argnames=('num_heads',))
def transformer_pallas(x, packed, num_heads):
    """Full Transformer forward in a single pallas_call (grid = (layers, FFN chunks))."""
    B, S, E = x.shape
    F = 4 * E
    L = packed['wqkv'].shape[0]
    assert E % num_heads == 0, "dim_embedding must be divisible by num_heads"
    TF = _pick_f_tile(F)
    NF = F // TF

    kernel = functools.partial(transformer_kernel, num_heads=num_heads, B=B, S=S, E=E)
    out2d = pl.pallas_call(
        kernel,
        out_shape=jax.ShapeDtypeStruct((B * S, E), x.dtype),
        grid=(L, NF),
        in_specs=[
            pl.BlockSpec(memory_space=pl.ANY),                          # x: stays in HBM, copied once
            pl.BlockSpec((None, 8, 3 * E), lambda l, f: (l, 0, 0)),     # packed LN params + biases
            pl.BlockSpec((None, E, 3 * E), lambda l, f: (l, 0, 0)),     # composed qkv projection
            pl.BlockSpec((None, E, E), lambda l, f: (l, 0, 0)),         # attention out_proj
            pl.BlockSpec((None, E, TF), lambda l, f: (l, 0, f)),        # fc1 weight chunk
            pl.BlockSpec((None, 1, TF), lambda l, f: (l, 0, f)),        # fc1 bias chunk
            pl.BlockSpec((None, TF, E), lambda l, f: (l, f, 0)),        # fc2 weight chunk
        ],
        out_specs=pl.BlockSpec((B * S, E), lambda l, f: (0, 0)),
        scratch_shapes=[pltpu.VMEM((B * S, E), jnp.float32),            # residual carry across layers
                        pltpu.VMEM((B * S, E), jnp.bfloat16)],          # LN2 acts reused by FFN chunks
        compiler_params=pltpu.CompilerParams(
            dimension_semantics=("arbitrary", "arbitrary"),             # sequential carry on both axes
            vmem_limit_bytes=_vmem_limit_bytes(B, S, E, TF)),
    )(x.reshape(B * S, E), packed['vec'], packed['wqkv'], packed['wo'],
      packed['w1'], packed['b1m'], packed['w2'])
    return out2d.reshape(B, S, E)


# ----------------------------- Params (deterministic, synthetic) -----------------------------

def init_layer_params(key, E):
    """Raw PyTorch-layout parameters of one TransformerLayer."""
    ks = jax.random.split(key, 6)
    scale = 0.02

    def lin(k, out_dim, in_dim):
        kw, kb = jax.random.split(k)
        w = jax.random.normal(kw, (out_dim, in_dim), jnp.float32) * scale  # (out, in)
        b = jax.random.normal(kb, (1, out_dim), jnp.float32) * scale
        return w, b

    p = {}
    p['g1'] = jnp.ones((1, E), jnp.float32)
    p['b1'] = jnp.zeros((1, E), jnp.float32)
    p['wq'], p['bq'] = lin(ks[0], E, E)            # to_queries
    p['wkv'], p['bkv'] = lin(ks[1], 2 * E, E)      # to_keys_values
    p['win'], p['bin'] = lin(ks[2], 3 * E, E)      # nn.MultiheadAttention in_proj
    p['wo'], p['bo'] = lin(ks[3], E, E)            # out_proj
    p['g2'] = jnp.ones((1, E), jnp.float32)
    p['b2'] = jnp.zeros((1, E), jnp.float32)
    p['w1'], p['b1m'] = lin(ks[4], 4 * E, E)       # mlp fc1
    p['w2'], p['b2m'] = lin(ks[5], E, 4 * E)       # mlp fc2
    return p


def prepare_params(layer_params, num_heads):
    """One-time fold/compose/transpose/pack of the raw params (hoisted out of the forward)."""
    E = layer_params[0]['wq'].shape[0]
    Dh = E // num_heads
    scale = 1.0 / float(Dh) ** 0.5
    E3 = 3 * E

    def pad3(v):
        return jnp.pad(v, (0, E3 - v.shape[0]))

    vecs, wqkvs, wos, w1s, w2s, b1ms = [], [], [], [], [], []
    for p in layer_params:
        win, binp = p['win'], p['bin'][0]
        wq_t, wkv_t = p['wq'].T, p['wkv'].T
        # Compose to_queries / to_keys_values with the MHA in_proj; fold softmax scale into q.
        wq_c = (wq_t @ win[:E].T) * scale
        bq_c = (p['bq'][0] @ win[:E].T + binp[:E]) * scale
        wk_c = wkv_t[:, :E] @ win[E:2 * E].T
        bk_c = p['bkv'][0, :E] @ win[E:2 * E].T + binp[E:2 * E]
        wv_c = wkv_t[:, E:] @ win[2 * E:].T
        bv_c = p['bkv'][0, E:] @ win[2 * E:].T + binp[2 * E:]

        wqkvs.append(jnp.concatenate([wq_c, wk_c, wv_c], axis=1))        # (E, 3E)
        bqkv = jnp.concatenate([bq_c, bk_c, bv_c])                       # (3E,)
        vecs.append(jnp.stack([pad3(p['g1'][0]), pad3(p['b1'][0]),
                               pad3(p['g2'][0]), pad3(p['b2'][0]),
                               pad3(p['bo'][0]), pad3(p['b2m'][0]),
                               bqkv, jnp.zeros((E3,), jnp.float32)]))    # (8, 3E)
        wos.append(p['wo'].T)                                            # (E, E)
        w1s.append(p['w1'].T)                                            # (E, 4E)
        w2s.append(p['w2'].T)                                            # (4E, E)
        b1ms.append(p['b1m'])                                            # (1, 4E)

    stack_bf16 = lambda lst: jnp.stack(lst).astype(jnp.bfloat16)
    return {
        'vec': jnp.stack(vecs).astype(jnp.float32),    # (L, 8, 3E)  LN params + biases (f32)
        'wqkv': stack_bf16(wqkvs),                     # (L, E, 3E)  composed qkv projection
        'wo': stack_bf16(wos),                         # (L, E, E)
        'w1': stack_bf16(w1s),                         # (L, E, 4E)
        'b1m': jnp.stack(b1ms).astype(jnp.float32),    # (L, 1, 4E)  fc1 bias (streamed per chunk)
        'w2': stack_bf16(w2s),                         # (L, 4E, E)
    }


# ----------------------------- Pure-JAX reference (f32, for sanity check) -----------------------------

def _ln_ref(x, g, b, eps=1e-5):
    mu = jnp.mean(x, axis=-1, keepdims=True)
    var = jnp.mean((x - mu) ** 2, axis=-1, keepdims=True)
    return (x - mu) / jnp.sqrt(var + eps) * g + b


def ref_layer(x, p, num_heads):
    B, S, E = x.shape
    Dh = E // num_heads
    h = _ln_ref(x, p['g1'][0], p['b1'][0])
    q0 = h @ p['wq'].T + p['bq'][0]
    kv = h @ p['wkv'].T + p['bkv'][0]
    k0, v0 = kv[..., :E], kv[..., E:]
    q = q0 @ p['win'][:E].T + p['bin'][0, :E]
    k = k0 @ p['win'][E:2 * E].T + p['bin'][0, E:2 * E]
    v = v0 @ p['win'][2 * E:].T + p['bin'][0, 2 * E:]
    qh = q.reshape(B, S, num_heads, Dh).transpose(0, 2, 1, 3)
    kh = k.reshape(B, S, num_heads, Dh).transpose(0, 2, 1, 3)
    vh = v.reshape(B, S, num_heads, Dh).transpose(0, 2, 1, 3)
    s = jnp.einsum('bhqd,bhkd->bhqk', qh, kh) / jnp.sqrt(Dh).astype(jnp.float32)
    pw = jax.nn.softmax(s, axis=-1)
    o = jnp.einsum('bhqk,bhkd->bhqd', pw, vh).transpose(0, 2, 1, 3).reshape(B, S, E)
    proj = o @ p['wo'].T + p['bo'][0]
    x = x + proj[0]                    # reference quirk: batch-0 output broadcast over batch
    h2 = _ln_ref(x, p['g2'][0], p['b2'][0])
    m = jnp.maximum(h2 @ p['w1'].T + p['b1m'][0], 0.0) @ p['w2'].T + p['b2m'][0]
    return x + m


def ref_transformer(x, layer_params, num_heads):
    for p in layer_params:
        x = ref_layer(x, p, num_heads)
    return x


# ----------------------------- Main -----------------------------

if __name__ == "__main__":
    # Small but lane-aligned shapes: E, 3E, F and the FFN chunk are all multiples of 128,
    # and F=512 -> two FFN chunks, exercising the streamed fc1/fc2 accumulation path.
    B, S, E = 2, 16, 128
    num_heads = 4
    num_layers = 2

    key = jax.random.PRNGKey(0)
    kx, kp = jax.random.split(key)
    x = jax.random.normal(kx, (B, S, E), jnp.float32)
    layer_params = [init_layer_params(k, E) for k in jax.random.split(kp, num_layers)]

    packed = prepare_params(layer_params, num_heads)   # one-time fold/transpose/pack

    out = transformer_pallas(x, packed, num_heads=num_heads)
    out = jax.block_until_ready(out)

    ref = ref_transformer(x, layer_params, num_heads)
    assert out.shape == (B, S, E)
    max_err = float(jnp.max(jnp.abs(out - ref)))
    # bf16 matmul operands (f32 accumulation, f32 LN/softmax/residual) -> tolerance looser than pure f32.
    assert jnp.allclose(out, ref, atol=3e-2, rtol=3e-2), f"Pallas output mismatch vs reference (max abs err {max_err})"

    print("KERNEL_OK")
</pallas_src>

<mosaic_0001>
module attributes {stable_mosaic.version = 11 : i64} {
  func.func @transformer_kernel(%arg0: i32, %arg1: i32, %arg2: memref<32x128xf32, #tpu.memory_space<any>>, %arg3: memref<1x8x384xf32, #tpu.memory_space<vmem>>, %arg4: memref<1x128x384xbf16, #tpu.memory_space<vmem>>, %arg5: memref<1x128x128xbf16, #tpu.memory_space<vmem>>, %arg6: memref<1x128x256xbf16, #tpu.memory_space<vmem>>, %arg7: memref<1x1x256xf32, #tpu.memory_space<vmem>>, %arg8: memref<1x256x128xbf16, #tpu.memory_space<vmem>>, %arg9: memref<32x128xf32, #tpu.memory_space<vmem>>, %arg10: memref<32x128xf32, #tpu.memory_space<vmem>>, %arg11: memref<32x128xbf16, #tpu.memory_space<vmem>>) attributes {dimension_semantics = [#tpu.dimension_semantics<arbitrary>, #tpu.dimension_semantics<arbitrary>], iteration_bounds = array<i64: 2, 2>, scalar_prefetch = 0 : i64, scratch_operands = 2 : i64, tpu.core_type = #tpu.core_type<tc>, window_params = [{}, {transform_indices = @transform_1, window_bounds = array<i64: 1, 8, 384>}, {transform_indices = @transform_2, window_bounds = array<i64: 1, 128, 384>}, {transform_indices = @transform_3, window_bounds = array<i64: 1, 128, 128>}, {transform_indices = @transform_4, window_bounds = array<i64: 1, 128, 256>}, {transform_indices = @transform_5, window_bounds = array<i64: 1, 1, 256>}, {transform_indices = @transform_6, window_bounds = array<i64: 1, 256, 128>}, {pipeline_mode = #tpu.pipeline_mode<synchronous>, transform_indices = @transform_7, window_bounds = array<i64: 32, 128>}]} {
    %c0_i32 = arith.constant 0 : i32
    %0 = arith.cmpi eq, %arg0, %c0_i32 : i32
    %c0_i32_0 = arith.constant 0 : i32
    %1 = arith.cmpi eq, %arg1, %c0_i32_0 : i32
    %2 = arith.andi %0, %1 : i1
    %3 = arith.extui %2 : i1 to i32
    %c0_i32_1 = arith.constant 0 : i32
    %4 = arith.cmpi ne, %3, %c0_i32_1 : i32
    scf.if %4 {
      "tpu.region"() ({
        %30 = tpu.sem_alloc : memref<!tpu.dma_semaphore, #tpu.memory_space<semaphore_mem>>
        tpu.enqueue_dma source(%arg2 : memref<32x128xf32, #tpu.memory_space<any>>) target(%arg10 : memref<32x128xf32, #tpu.memory_space<vmem>>) target_semaphore(%30 : memref<!tpu.dma_semaphore, #tpu.memory_space<semaphore_mem>>)
        tpu.wait_dma2 semaphore(%30 : memref<!tpu.dma_semaphore, #tpu.memory_space<semaphore_mem>>) src(%arg2 : memref<32x128xf32, #tpu.memory_space<any>>) dst(%arg10 : memref<32x128xf32, #tpu.memory_space<vmem>>)
        tpu.yield
      }) : () -> ()
    } else {
    }
    %c0_i32_2 = arith.constant 0 : i32
    %5 = arith.cmpi eq, %arg1, %c0_i32_2 : i32
    %6 = arith.extui %5 : i1 to i32
    %c0_i32_3 = arith.constant 0 : i32
    %7 = arith.cmpi ne, %6, %c0_i32_3 : i32
    scf.if %7 {
      %c0_22 = arith.constant 0 : index
      %c0_23 = arith.constant 0 : index
      %c0_24 = arith.constant 0 : index
      %30 = vector.load %arg3[%c0_22, %c0_23, %c0_24] : memref<1x8x384xf32, #tpu.memory_space<vmem>>, vector<1x8x384xf32>
      %31 = vector.shape_cast %30 : vector<1x8x384xf32> to vector<8x384xf32>
      %32 = vector.extract_strided_slice %31 {offsets = [0, 0], sizes = [1, 128], strides = [1, 1]} : vector<8x384xf32> to vector<1x128xf32>
      %33 = vector.extract_strided_slice %31 {offsets = [1, 0], sizes = [1, 128], strides = [1, 1]} : vector<8x384xf32> to vector<1x128xf32>
      %34 = vector.extract_strided_slice %31 {offsets = [2, 0], sizes = [1, 128], strides = [1, 1]} : vector<8x384xf32> to vector<1x128xf32>
      %35 = vector.extract_strided_slice %31 {offsets = [3, 0], sizes = [1, 128], strides = [1, 1]} : vector<8x384xf32> to vector<1x128xf32>
      %36 = vector.extract_strided_slice %31 {offsets = [4, 0], sizes = [1, 128], strides = [1, 1]} : vector<8x384xf32> to vector<1x128xf32>
      %37 = vector.extract_strided_slice %31 {offsets = [5, 0], sizes = [1, 128], strides = [1, 1]} : vector<8x384xf32> to vector<1x128xf32>
      %38 = vector.extract_strided_slice %31 {offsets = [6, 0], sizes = [1, 384], strides = [1, 1]} : vector<8x384xf32> to vector<1x384xf32>
      %c0_25 = arith.constant 0 : index
      %c0_26 = arith.constant 0 : index
      %39 = vector.load %arg10[%c0_25, %c0_26] : memref<32x128xf32, #tpu.memory_space<vmem>>, vector<32x128xf32>
      %40 = vector.extract_strided_slice %39 {offsets = [0, 0], sizes = [16, 128], strides = [1, 1]} : vector<32x128xf32> to vector<16x128xf32>
      %cst_27 = arith.constant dense<0.000000e+00> : vector<16xf32>
      %41 = vector.multi_reduction <add>, %40, %cst_27 [1] : vector<16x128xf32> to vector<16xf32>
      %42 = vector.shape_cast %41 : vector<16xf32> to vector<16x1xf32>
      %cst_28 = arith.constant 1.280000e+02 : f32
      %43 = vector.broadcast %cst_28 : f32 to vector<16x1xf32>
      %44 = arith.divf %42, %43 : vector<16x1xf32>
      %45 = vector.broadcast %44 : vector<16x1xf32> to vector<16x128xf32>
      %46 = arith.subf %40, %45 : vector<16x128xf32>
      %47 = arith.mulf %46, %46 : vector<16x128xf32>
      %cst_29 = arith.constant dense<0.000000e+00> : vector<16xf32>
      %48 = vector.multi_reduction <add>, %47, %cst_29 [1] : vector<16x128xf32> to vector<16xf32>
      %49 = vector.shape_cast %48 : vector<16xf32> to vector<16x1xf32>
      %cst_30 = arith.constant 1.280000e+02 : f32
      %50 = vector.broadcast %cst_30 : f32 to vector<16x1xf32>
      %51 = arith.divf %49, %50 : vector<16x1xf32>
      %52 = vector.broadcast %44 : vector<16x1xf32> to vector<16x128xf32>
      %53 = arith.subf %40, %52 : vector<16x128xf32>
      %cst_31 = arith.constant 9.99999974E-6 : f32
      %54 = vector.broadcast %cst_31 : f32 to vector<16x1xf32>
      %55 = arith.addf %51, %54 : vector<16x1xf32>
      %56 = math.rsqrt %55 : vector<16x1xf32>
      %57 = vector.broadcast %56 : vector<16x1xf32> to vector<16x128xf32>
      %58 = arith.mulf %53, %57 : vector<16x128xf32>
      %59 = vector.broadcast %32 : vector<1x128xf32> to vector<16x128xf32>
      %60 = arith.mulf %58, %59 : vector<16x128xf32>
      %61 = vector.broadcast %33 : vector<1x128xf32> to vector<16x128xf32>
      %62 = arith.addf %60, %61 : vector<16x128xf32>
      %63 = arith.truncf %62 : vector<16x128xf32> to vector<16x128xbf16>
      %c0_32 = arith.constant 0 : index
      %c0_33 = arith.constant 0 : index
      %c0_34 = arith.constant 0 : index
      %64 = vector.load %arg4[%c0_32, %c0_33, %c0_34] : memref<1x128x384xbf16, #tpu.memory_space<vmem>>, vector<1x128x384xbf16>
      %65 = vector.shape_cast %64 : vector<1x128x384xbf16> to vector<128x384xbf16>
      %cst_35 = arith.constant dense<0.000000e+00> : vector<16x384xf32>
      %66 = tpu.matmul %63, %65, %cst_35 {dimension_numbers = #tpu.dot_dimension_numbers<[1], [0], [0], [1], [0, 0, 1, 1], [], []>} : vector<16x128xbf16>, vector<128x384xbf16>, vector<16x384xf32> -> vector<16x384xf32>
      %67 = vector.broadcast %38 : vector<1x384xf32> to vector<16x384xf32>
      %68 = arith.addf %66, %67 : vector<16x384xf32>
      %69 = arith.truncf %68 : vector<16x384xf32> to vector<16x384xbf16>
      %c0_36 = arith.constant 0 : index
      %c0_37 = arith.constant 0 : index
      %c0_38 = arith.constant 0 : index
      %70 = vector.load %arg5[%c0_36, %c0_37, %c0_38] : memref<1x128x128xbf16, #tpu.memory_space<vmem>>, vector<1x128x128xbf16>
      %71 = vector.shape_cast %70 : vector<1x128x128xbf16> to vector<128x128xbf16>
      %72 = vector.extract_strided_slice %69 {offsets = [0, 0], sizes = [16, 32], strides = [1, 1]} : vector<16x384xbf16> to vector<16x32xbf16>
      %73 = vector.extract_strided_slice %69 {offsets = [0, 128], sizes = [16, 32], strides = [1, 1]} : vector<16x384xbf16> to vector<16x32xbf16>
      %74 = vector.extract_strided_slice %69 {offsets = [0, 256], sizes = [16, 32], strides = [1, 1]} : vector<16x384xbf16> to vector<16x32xbf16>
      %cst_39 = arith.constant dense<0.000000e+00> : vector<16x16xf32>
      %75 = tpu.matmul %72, %73, %cst_39 {dimension_numbers = #tpu.dot_dimension_numbers<[1], [1], [0], [0], [0, 0, 1, 0], [], []>} : vector<16x32xbf16>, vector<16x32xbf16>, vector<16x16xf32> -> vector<16x16xf32>
      %cst_40 = arith.constant dense<0xFF800000> : vector<16xf32>
      %76 = vector.multi_reduction <maximumf>, %75, %cst_40 [1] : vector<16x16xf32> to vector<16xf32>
      %77 = vector.shape_cast %76 : vector<16xf32> to vector<16x1xf32>
      %78 = vector.broadcast %77 : vector<16x1xf32> to vector<16x16xf32>
      %79 = arith.subf %75, %78 : vector<16x16xf32>
      %80 = math.exp %79 : vector<16x16xf32>
      %cst_41 = arith.constant dense<0.000000e+00> : vector<16xf32>
      %81 = vector.multi_reduction <add>, %80, %cst_41 [1] : vector<16x16xf32> to vector<16xf32>
      %82 = vector.shape_cast %81 : vector<16xf32> to vector<16x1xf32>
      %83 = vector.broadcast %82 : vector<16x1xf32> to vector<16x16xf32>
      %84 = arith.divf %80, %83 : vector<16x16xf32>
      %85 = arith.truncf %84 : vector<16x16xf32> to vector<16x16xbf16>
      %cst_42 = arith.constant dense<0.000000e+00> : vector<16x32xf32>
      %86 = tpu.matmul %85, %74, %cst_42 {dimension_numbers = #tpu.dot_dimension_numbers<[1], [0], [0], [1], [0, 0, 1, 1], [], []>} : vector<16x16xbf16>, vector<16x32xbf16>, vector<16x32xf32> -> vector<16x32xf32>
      %87 = arith.truncf %86 : vector<16x32xf32> to vector<16x32xbf16>
      %88 = vector.extract_strided_slice %71 {offsets = [0, 0], sizes = [32, 128], strides = [1, 1]} : vector<128x128xbf16> to vector<32x128xbf16>
      %cst_43 = arith.constant dense<0.000000e+00> : vector<16x128xf32>
      %89 = tpu.matmul %87, %88, %cst_43 {dimension_numbers = #tpu.dot_dimension_numbers<[1], [0], [0], [1], [0, 0, 1, 1], [], []>} : vector<16x32xbf16>, vector<32x128xbf16>, vector<16x128xf32> -> vector<16x128xf32>
      %90 = vector.broadcast %36 : vector<1x128xf32> to vector<16x128xf32>
      %91 = arith.addf %90, %89 : vector<16x128xf32>
      %92 = vector.extract_strided_slice %69 {offsets = [0, 32], sizes = [16, 32], strides = [1, 1]} : vector<16x384xbf16> to vector<16x32xbf16>
      %93 = vector.extract_strided_slice %69 {offsets = [0, 160], sizes = [16, 32], strides = [1, 1]} : vector<16x384xbf16> to vector<16x32xbf16>
      %94 = vector.extract_strided_slice %69 {offsets = [0, 288], sizes = [16, 32], strides = [1, 1]} : vector<16x384xbf16> to vector<16x32xbf16>
      %cst_44 = arith.constant dense<0.000000e+00> : vector<16x16xf32>
      %95 = tpu.matmul %92, %93, %cst_44 {dimension_numbers = #tpu.dot_dimension_numbers<[1], [1], [0], [0], [0, 0, 1, 0], [], []>} : vector<16x32xbf16>, vector<16x32xbf16>, vector<16x16xf32> -> vector<16x16xf32>
      %cst_45 = arith.constant dense<0xFF800000> : vector<16xf32>
      %96 = vector.multi_reduction <maximumf>, %95, %cst_45 [1] : vector<16x16xf32> to vector<16xf32>
      %97 = vector.shape_cast %96 : vector<16xf32> to vector<16x1xf32>
      %98 = vector.broadcast %97 : vector<16x1xf32> to vector<16x16xf32>
      %99 = arith.subf %95, %98 : vector<16x16xf32>
      %100 = math.exp %99 : vector<16x16xf32>
      %cst_46 = arith.constant dense<0.000000e+00> : vector<16xf32>
      %101 = vector.multi_reduction <add>, %100, %cst_46 [1] : vector<16x16xf32> to vector<16xf32>
      %102 = vector.shape_cast %101 : vector<16xf32> to vector<16x1xf32>
      %103 = vector.broadcast %102 : vector<16x1xf32> to vector<16x16xf32>
      %104 = arith.divf %100, %103 : vector<16x16xf32>
      %105 = arith.truncf %104 : vector<16x16xf32> to vector<16x16xbf16>
      %cst_47 = arith.constant dense<0.000000e+00> : vector<16x32xf32>
      %106 = tpu.matmul %105, %94, %cst_47 {dimension_numbers = #tpu.dot_dimension_numbers<[1], [0], [0], [1], [0, 0, 1, 1], [], []>} : vector<16x16xbf16>, vector<16x32xbf16>, vector<16x32xf32> -> vector<16x32xf32>
      %107 = arith.truncf %106 : vector<16x32xf32> to vector<16x32xbf16>
      %108 = vector.extract_strided_slice %71 {offsets = [32, 0], sizes = [32, 128], strides = [1, 1]} : vector<128x128xbf16> to vector<32x128xbf16>
      %cst_48 = arith.constant dense<0.000000e+00> : vector<16x128xf32>
      %109 = tpu.matmul %107, %108, %cst_48 {dimension_numbers = #tpu.dot_dimension_numbers<[1], [0], [0], [1], [0, 0, 1, 1], [], []>} : vector<16x32xbf16>, vector<32x128xbf16>, vector<16x128xf32> -> vector<16x128xf32>
      %110 = arith.addf %91, %109 : vector<16x128xf32>
      %111 = vector.extract_strided_slice %69 {offsets = [0, 64], sizes = [16, 32], strides = [1, 1]} : vector<16x384xbf16> to vector<16x32xbf16>
      %112 = vector.extract_strided_slice %69 {offsets = [0, 192], sizes = [16, 32], strides = [1, 1]} : vector<16x384xbf16> to vector<16x32xbf16>
      %113 = vector.extract_strided_slice %69 {offsets = [0, 320], sizes = [16, 32], strides = [1, 1]} : vector<16x384xbf16> to vector<16x32xbf16>
      %cst_49 = arith.constant dense<0.000000e+00> : vector<16x16xf32>
      %114 = tpu.matmul %111, %112, %cst_49 {dimension_numbers = #tpu.dot_dimension_numbers<[1], [1], [0], [0], [0, 0, 1, 0], [], []>} : vector<16x32xbf16>, vector<16x32xbf16>, vector<16x16xf32> -> vector<16x16xf32>
      %cst_50 = arith.constant dense<0xFF800000> : vector<16xf32>
      %115 = vector.multi_reduction <maximumf>, %114, %cst_50 [1] : vector<16x16xf32> to vector<16xf32>
      %116 = vector.shape_cast %115 : vector<16xf32> to vector<16x1xf32>
      %117 = vector.broadcast %116 : vector<16x1xf32> to vector<16x16xf32>
      %118 = arith.subf %114, %117 : vector<16x16xf32>
      %119 = math.exp %118 : vector<16x16xf32>
      %cst_51 = arith.constant dense<0.000000e+00> : vector<16xf32>
      %120 = vector.multi_reduction <add>, %119, %cst_51 [1] : vector<16x16xf32> to vector<16xf32>
      %121 = vector.shape_cast %120 : vector<16xf32> to vector<16x1xf32>
      %122 = vector.broadcast %121 : vector<16x1xf32> to vector<16x16xf32>
      %123 = arith.divf %119, %122 : vector<16x16xf32>
      %124 = arith.truncf %123 : vector<16x16xf32> to vector<16x16xbf16>
      %cst_52 = arith.constant dense<0.000000e+00> : vector<16x32xf32>
      %125 = tpu.matmul %124, %113, %cst_52 {dimension_numbers = #tpu.dot_dimension_numbers<[1], [0], [0], [1], [0, 0, 1, 1], [], []>} : vector<16x16xbf16>, vector<16x32xbf16>, vector<16x32xf32> -> vector<16x32xf32>
      %126 = arith.truncf %125 : vector<16x32xf32> to vector<16x32xbf16>
      %127 = vector.extract_strided_slice %71 {offsets = [64, 0], sizes = [32, 128], strides = [1, 1]} : vector<128x128xbf16> to vector<32x128xbf16>
      %cst_53 = arith.constant dense<0.000000e+00> : vector<16x128xf32>
      %128 = tpu.matmul %126, %127, %cst_53 {dimension_numbers = #tpu.dot_dimension_numbers<[1], [0], [0], [1], [0, 0, 1, 1], [], []>} : vector<16x32xbf16>, vector<32x128xbf16>, vector<16x128xf32> -> vector<16x128xf32>
      %129 = arith.addf %110, %128 : vector<16x128xf32>
      %130 = vector.extract_strided_slice %69 {offsets = [0, 96], sizes = [16, 32], strides = [1, 1]} : vector<16x384xbf16> to vector<16x32xbf16>
      %131 = vector.extract_strided_slice %69 {offsets = [0, 224], sizes = [16, 32], strides = [1, 1]} : vector<16x384xbf16> to vector<16x32xbf16>
      %132 = vector.extract_strided_slice %69 {offsets = [0, 352], sizes = [16, 32], strides = [1, 1]} : vector<16x384xbf16> to vector<16x32xbf16>
      %cst_54 = arith.constant dense<0.000000e+00> : vector<16x16xf32>
      %133 = tpu.matmul %130, %131, %cst_54 {dimension_numbers = #tpu.dot_dimension_numbers<[1], [1], [0], [0], [0, 0, 1, 0], [], []>} : vector<16x32xbf16>, vector<16x32xbf16>, vector<16x16xf32> -> vector<16x16xf32>
      %cst_55 = arith.constant dense<0xFF800000> : vector<16xf32>
      %134 = vector.multi_reduction <maximumf>, %133, %cst_55 [1] : vector<16x16xf32> to vector<16xf32>
      %135 = vector.shape_cast %134 : vector<16xf32> to vector<16x1xf32>
      %136 = vector.broadcast %135 : vector<16x1xf32> to vector<16x16xf32>
      %137 = arith.subf %133, %136 : vector<16x16xf32>
      %138 = math.exp %137 : vector<16x16xf32>
      %cst_56 = arith.constant dense<0.000000e+00> : vector<16xf32>
      %139 = vector.multi_reduction <add>, %138, %cst_56 [1] : vector<16x16xf32> to vector<16xf32>
      %140 = vector.shape_cast %139 : vector<16xf32> to vector<16x1xf32>
      %141 = vector.broadcast %140 : vector<16x1xf32> to vector<16x16xf32>
      %142 = arith.divf %138, %141 : vector<16x16xf32>
      %143 = arith.truncf %142 : vector<16x16xf32> to vector<16x16xbf16>
      %cst_57 = arith.constant dense<0.000000e+00> : vector<16x32xf32>
      %144 = tpu.matmul %143, %132, %cst_57 {dimension_numbers = #tpu.dot_dimension_numbers<[1], [0], [0], [1], [0, 0, 1, 1], [], []>} : vector<16x16xbf16>, vector<16x32xbf16>, vector<16x32xf32> -> vector<16x32xf32>
      %145 = arith.truncf %144 : vector<16x32xf32> to vector<16x32xbf16>
      %146 = vector.extract_strided_slice %71 {offsets = [96, 0], sizes = [32, 128], strides = [1, 1]} : vector<128x128xbf16> to vector<32x128xbf16>
      %cst_58 = arith.constant dense<0.000000e+00> : vector<16x128xf32>
      %147 = tpu.matmul %145, %146, %cst_58 {dimension_numbers = #tpu.dot_dimension_numbers<[1], [0], [0], [1], [0, 0, 1, 1], [], []>} : vector<16x32xbf16>, vector<32x128xbf16>, vector<16x128xf32> -> vector<16x128xf32>
      %148 = arith.addf %129, %147 : vector<16x128xf32>
      %149 = vector.shape_cast %39 : vector<32x128xf32> to vector<2x16x128xf32>
      %150 = vector.shape_cast %148 : vector<16x128xf32> to vector<1x16x128xf32>
      %151 = vector.broadcast %150 : vector<1x16x128xf32> to vector<2x16x128xf32>
      %152 = arith.addf %149, %151 : vector<2x16x128xf32>
      %153 = vector.shape_cast %152 : vector<2x16x128xf32> to vector<32x128xf32>
      %cst_59 = arith.constant dense<0.000000e+00> : vector<32xf32>
      %154 = vector.multi_reduction <add>, %153, %cst_59 [1] : vector<32x128xf32> to vector<32xf32>
      %155 = vector.shape_cast %154 : vector<32xf32> to vector<32x1xf32>
      %cst_60 = arith.constant 1.280000e+02 : f32
      %156 = vector.broadcast %cst_60 : f32 to vector<32x1xf32>
      %157 = arith.divf %155, %156 : vector<32x1xf32>
      %158 = vector.broadcast %157 : vector<32x1xf32> to vector<32x128xf32>
      %159 = arith.subf %153, %158 : vector<32x128xf32>
      %160 = arith.mulf %159, %159 : vector<32x128xf32>
      %cst_61 = arith.constant dense<0.000000e+00> : vector<32xf32>
      %161 = vector.multi_reduction <add>, %160, %cst_61 [1] : vector<32x128xf32> to vector<32xf32>
      %162 = vector.shape_cast %161 : vector<32xf32> to vector<32x1xf32>
      %cst_62 = arith.constant 1.280000e+02 : f32
      %163 = vector.broadcast %cst_62 : f32 to vector<32x1xf32>
      %164 = arith.divf %162, %163 : vector<32x1xf32>
      %165 = vector.broadcast %157 : vector<32x1xf32> to vector<32x128xf32>
      %166 = arith.subf %153, %165 : vector<32x128xf32>
      %cst_63 = arith.constant 9.99999974E-6 : f32
      %167 = vector.broadcast %cst_63 : f32 to vector<32x1xf32>
      %168 = arith.addf %164, %167 : vector<32x1xf32>
      %169 = math.rsqrt %168 : vector<32x1xf32>
      %170 = vector.broadcast %169 : vector<32x1xf32> to vector<32x128xf32>
      %171 = arith.mulf %166, %170 : vector<32x128xf32>
      %172 = vector.broadcast %34 : vector<1x128xf32> to vector<32x128xf32>
      %173 = arith.mulf %171, %172 : vector<32x128xf32>
      %174 = vector.broadcast %35 : vector<1x128xf32> to vector<32x128xf32>
      %175 = arith.addf %173, %174 : vector<32x128xf32>
      %176 = arith.truncf %175 : vector<32x128xf32> to vector<32x128xbf16>
      %c0_64 = arith.constant 0 : index
      %c0_65 = arith.constant 0 : index
      %177 = vector.load %arg11[%c0_64, %c0_65] : memref<32x128xbf16, #tpu.memory_space<vmem>>, vector<32x128xbf16>
      tpu.vector_store %arg11[%c0_64, %c0_65], %176 {strides = array<i32>} : memref<32x128xbf16, #tpu.memory_space<vmem>>, vector<32x128xbf16>,
      %178 = vector.broadcast %37 : vector<1x128xf32> to vector<32x128xf32>
      %179 = arith.addf %153, %178 : vector<32x128xf32>
      %c0_66 = arith.constant 0 : index
      %c0_67 = arith.constant 0 : index
      %180 = vector.load %arg10[%c0_66, %c0_67] : memref<32x128xf32, #tpu.memory_space<vmem>>, vector<32x128xf32>
      tpu.vector_store %arg10[%c0_66, %c0_67], %179 {strides = array<i32>} : memref<32x128xf32, #tpu.memory_space<vmem>>, vector<32x128xf32>,
    } else {
    }
    %c0 = arith.constant 0 : index
    %c0_4 = arith.constant 0 : index
    %8 = vector.load %arg11[%c0, %c0_4] : memref<32x128xbf16, #tpu.memory_space<vmem>>, vector<32x128xbf16>
    %c0_5 = arith.constant 0 : index
    %c0_6 = arith.constant 0 : index
    %c0_7 = arith.constant 0 : index
    %9 = vector.load %arg6[%c0_5, %c0_6, %c0_7] : memref<1x128x256xbf16, #tpu.memory_space<vmem>>, vector<1x128x256xbf16>
    %10 = vector.shape_cast %9 : vector<1x128x256xbf16> to vector<128x256xbf16>
    %cst = arith.constant dense<0.000000e+00> : vector<32x256xf32>
    %11 = tpu.matmul %8, %10, %cst {dimension_numbers = #tpu.dot_dimension_numbers<[1], [0], [0], [1], [0, 0, 1, 1], [], []>} : vector<32x128xbf16>, vector<128x256xbf16>, vector<32x256xf32> -> vector<32x256xf32>
    %c0_8 = arith.constant 0 : index
    %c0_9 = arith.constant 0 : index
    %c0_10 = arith.constant 0 : index
    %12 = vector.load %arg7[%c0_8, %c0_9, %c0_10] : memref<1x1x256xf32, #tpu.memory_space<vmem>>, vector<1x1x256xf32>
    %13 = vector.shape_cast %12 : vector<1x1x256xf32> to vector<1x256xf32>
    %14 = vector.broadcast %13 : vector<1x256xf32> to vector<32x256xf32>
    %15 = arith.addf %11, %14 : vector<32x256xf32>
    %cst_11 = arith.constant 0.000000e+00 : f32
    %16 = vector.broadcast %cst_11 : f32 to vector<32x256xf32>
    %17 = arith.maximumf %15, %16 : vector<32x256xf32>
    %c0_12 = arith.constant 0 : index
    %c0_13 = arith.constant 0 : index
    %18 = vector.load %arg10[%c0_12, %c0_13] : memref<32x128xf32, #tpu.memory_space<vmem>>, vector<32x128xf32>
    %19 = arith.truncf %17 : vector<32x256xf32> to vector<32x256xbf16>
    %c0_14 = arith.constant 0 : index
    %c0_15 = arith.constant 0 : index
    %c0_16 = arith.constant 0 : index
    %20 = vector.load %arg8[%c0_14, %c0_15, %c0_16] : memref<1x256x128xbf16, #tpu.memory_space<vmem>>, vector<1x256x128xbf16>
    %21 = vector.shape_cast %20 : vector<1x256x128xbf16> to vector<256x128xbf16>
    %cst_17 = arith.constant dense<0.000000e+00> : vector<32x128xf32>
    %22 = tpu.matmul %19, %21, %cst_17 {dimension_numbers = #tpu.dot_dimension_numbers<[1], [0], [0], [1], [0, 0, 1, 1], [], []>} : vector<32x256xbf16>, vector<256x128xbf16>, vector<32x128xf32> -> vector<32x128xf32>
    %23 = arith.addf %18, %22 : vector<32x128xf32>
    %c0_18 = arith.constant 0 : index
    %c0_19 = arith.constant 0 : index
    %24 = vector.load %arg10[%c0_18, %c0_19] : memref<32x128xf32, #tpu.memory_space<vmem>>, vector<32x128xf32>
    tpu.vector_store %arg10[%c0_18, %c0_19], %23 {strides = array<i32>} : memref<32x128xf32, #tpu.memory_space<vmem>>, vector<32x128xf32>,
    %c1_i32 = arith.constant 1 : i32
    %25 = arith.cmpi eq, %arg0, %c1_i32 : i32
    %c1_i32_20 = arith.constant 1 : i32
    %26 = arith.cmpi eq, %arg1, %c1_i32_20 : i32
    %27 = arith.andi %25, %26 : i1
    %28 = arith.extui %27 : i1 to i32
    %c0_i32_21 = arith.constant 0 : i32
    %29 = arith.cmpi ne, %28, %c0_i32_21 : i32
    scf.if %29 {
      %c0_22 = arith.constant 0 : index
      %c0_23 = arith.constant 0 : index
      %30 = vector.load %arg10[%c0_22, %c0_23] : memref<32x128xf32, #tpu.memory_space<vmem>>, vector<32x128xf32>
      %c0_24 = arith.constant 0 : index
      %c0_25 = arith.constant 0 : index
      %31 = vector.load %arg9[%c0_24, %c0_25] : memref<32x128xf32, #tpu.memory_space<vmem>>, vector<32x128xf32>
      tpu.vector_store %arg9[%c0_24, %c0_25], %30 {strides = array<i32>} : memref<32x128xf32, #tpu.memory_space<vmem>>, vector<32x128xf32>,
    } else {
    }
    return
  }
  func.func @transform_1(%arg0: i32, %arg1: i32) -> (i32, i32, i32) {
    %c0_i32 = arith.constant 0 : i32
    %c0_i32_0 = arith.constant 0 : i32
    %c0_i32_1 = arith.constant 0 : i32
    return %arg0, %c0_i32, %c0_i32_0 : i32, i32, i32
  }
  func.func @transform_2(%arg0: i32, %arg1: i32) -> (i32, i32, i32) {
    %c0_i32 = arith.constant 0 : i32
    %c0_i32_0 = arith.constant 0 : i32
    %c0_i32_1 = arith.constant 0 : i32
    return %arg0, %c0_i32, %c0_i32_0 : i32, i32, i32
  }
  func.func @transform_3(%arg0: i32, %arg1: i32) -> (i32, i32, i32) {
    %c0_i32 = arith.constant 0 : i32
    %c0_i32_0 = arith.constant 0 : i32
    %c0_i32_1 = arith.constant 0 : i32
    return %arg0, %c0_i32, %c0_i32_0 : i32, i32, i32
  }
  func.func @transform_4(%arg0: i32, %arg1: i32) -> (i32, i32, i32) {
    %c0_i32 = arith.constant 0 : i32
    %c0_i32_0 = arith.constant 0 : i32
    return %arg0, %c0_i32, %arg1 : i32, i32, i32
  }
  func.func @transform_5(%arg0: i32, %arg1: i32) -> (i32, i32, i32) {
    %c0_i32 = arith.constant 0 : i32
    %c0_i32_0 = arith.constant 0 : i32
    return %arg0, %c0_i32, %arg1 : i32, i32, i32
  }
  func.func @transform_6(%arg0: i32, %arg1: i32) -> (i32, i32, i32) {
    %c0_i32 = arith.constant 0 : i32
    %c0_i32_0 = arith.constant 0 : i32
    return %arg0, %arg1, %c0_i32 : i32, i32, i32
  }
  func.func @transform_7(%arg0: i32, %arg1: i32) -> (i32, i32) {
    %c0_i32 = arith.constant 0 : i32
    %c0_i32_0 = arith.constant 0 : i32
    %c0_i32_1 = arith.constant 0 : i32
    return %c0_i32, %c0_i32_0 : i32, i32
  }
}

</mosaic_0001>

<llo_original>
// kernel: transformer_pallas.1
$region0: #{transformer_pallas.1}
  #allocation0 [shape = 'u32[]', space=smem, size = 0x4, offset = 0x4, fixed_abs, tag = 'smem constant byte address 0x4 - core index']
  #allocation1 [shape = 'u32[144,128]{1,0:T(1,128)}', space=vmem, size = 0x12000, scoped, tag = 'internal scratch']
  #allocation2 [shape = 'f32[32,128]{1,0:T(8,128)}', space=vmem, size = 0x4000, scoped, tag = 'scratch operand']
  #allocation3 [shape = 'bf16[32,128]{1,0:T(8,128)(2,1)}', space=vmem, size = 0x2000, scoped, tag = 'scratch operand']
  #allocation17 [shape = 's32[]', space=sflag, size = 0x4, offset = 0, fixed_abs, tag = 'sflag constant byte address 0x0 - dummy sync flag']
  #allocation18 [shape = 's32[]', space=sflag, size = 0x4, offset = 0, fixed_abs, tag = 'sflag constant byte address 0x0 - dummy sync flag']
  #allocation19 [shape = 'u32[]', space=smem, size = 0x4, offset = 0x44, fixed_abs, tag = 'smem constant byte address 0x44 - assertion arg 0']
  #allocation20 [shape = 'u32[]', space=smem, size = 0x4, offset = 0x48, fixed_abs, tag = 'smem constant byte address 0x48 - assertion arg 1']
  %s0 = inlined_call_operand.hbm [shape: f32[32,128], index: 0, kind: input, shape index: {}]
  %s1 = inlined_call_operand.hbm [shape: f32[2,8,384], index: 1, kind: input, shape index: {}]
  %s2 = inlined_call_operand.hbm [shape: bf16[2,128,384], index: 2, kind: input, shape index: {}]
  %s3 = inlined_call_operand.hbm [shape: bf16[2,128,128], index: 3, kind: input, shape index: {}]
  %s4 = inlined_call_operand.hbm [shape: bf16[2,128,512], index: 4, kind: input, shape index: {}]
  %s5 = inlined_call_operand.hbm [shape: f32[2,1,512], index: 5, kind: input, shape index: {}]
  %s6 = inlined_call_operand.hbm [shape: bf16[2,512,128], index: 6, kind: input, shape index: {}]
  %s7 = inlined_call_operand.hbm [shape: f32[32,128], index: 7, kind: output, shape index: {}]
  %s8 = sld [smem:[#allocation0]]
  $region98: #{transformer_pallas.1} parent=0
    _
  %s10 = ssub.s32 1, %s8
  %s11 = scalar_select 0, %s10, %s8
  $region1: #{transformer_pallas.1} parent=0
    #allocation4 [shape = 'u8[24576]{0}', space=vmem, size = 0x6000, scoped, tag = 'input window, operand 1']
    #allocation5 [shape = 's32[2]{0}', space=sflag, size = 0x8, scoped, tag = 'scoped memory for transformer_pallas.1']
    #allocation6 [shape = 's32[2]{0}', space=sflag, size = 0x8, scoped, tag = 'scoped memory for transformer_pallas.1']
    #allocation7 [shape = 'u8[196608]{0}', space=vmem, size = 0x30000, scoped, tag = 'input window, operand 2']
    #allocation8 [shape = 's32[2]{0}', space=sflag, size = 0x8, scoped, tag = 'scoped memory for transformer_pallas.1']
    #allocation9 [shape = 'u8[65536]{0}', space=vmem, size = 0x10000, scoped, tag = 'input window, operand 3']
    #allocation10 [shape = 'u8[131072]{0}', space=vmem, size = 0x20000, scoped, tag = 'input window, operand 4']
    #allocation11 [shape = 's32[2]{0}', space=sflag, size = 0x8, scoped, tag = 'scoped memory for transformer_pallas.1']
    #allocation12 [shape = 'u8[2048]{0}', space=vmem, size = 0x800, scoped, tag = 'input window, operand 5']
    #allocation13 [shape = 'u8[131072]{0}', space=vmem, size = 0x20000, scoped, tag = 'input window, operand 6']
    #allocation14 [shape = 's32[2]{0}', space=sflag, size = 0x8, scoped, tag = 'scoped memory for transformer_pallas.1']
    #allocation15 [shape = 'u8[16384]{0}', space=vmem, size = 0x4000, scoped, tag = 'output window, operand 0, single buffered']
    %12 = vsyncpa [#allocation5], 0
    %s13 = scalar_lea.sflag [#allocation5], 1
    %14 = vsyncpa %s13, 0
    %15 = vsyncpa [#allocation8], 0
    %s16 = scalar_lea.sflag [#allocation8], 1
    %17 = vsyncpa %s16, 0
    %18 = vsyncpa [#allocation11], 0
    %s19 = scalar_lea.sflag [#allocation11], 1
    %20 = vsyncpa %s19, 0
    %21 = vsyncpa [#allocation14], 0
    %s22 = scalar_lea.sflag [#allocation14], 1
    %23 = vsyncpa %s22, 0
    %24 = vsyncpa [#allocation6], 0
    loop: start=0, step=1, limit=6
    $region2: #{transformer_pallas.1} parent=1 // loop_pre_header
      _
    $region3: #{transformer_pallas.1} parent=1 // loop_header
      %s26 = sphi 0, %s30
      %p27 = scmp.ge.s32.totalorder %s26, 6
      %s33 = sphi 0, %s45
      %s34 = sphi 0, %s41
      %s35 = sphi 0, %s33
      %s36 = sphi 0, %s34
      %s37 = sphi 0, %s35
      %s38 = sphi 0, %s36
      %s48 = sphi 0, %s50
      %s51 = sphi 0, %s48
      %s52 = sphi 0, %s51
      %s68 = sphi 0, %s52
      %s74 = sphi 0, %s76
      %s77 = sphi 0, %s74
      %s78 = sphi 0, %s77
      %s94 = sphi 0, %s78
      %s100 = sphi 0, %s102
      %s103 = sphi 0, %s100
      %s104 = sphi 0, %s103
      %s120 = sphi 0, %s104
      %s128 = sphi 0, %s130
      %s131 = sphi 0, %s128
      %s132 = sphi 0, %s131
      %s148 = sphi 0, %s132
      %s156 = sphi 0, %s158
      %s159 = sphi 0, %s156
      %s160 = sphi 0, %s159
      %s176 = sphi 0, %s160
      %s184 = sphi 0, %s186
      %s187 = sphi 0, %s184
      %s188 = sphi 0, %s187
      %s204 = sphi 0, %s188
      %s208 = sphi 0, %s208
      %s210 = sphi 0, %s208
      %s211 = sphi 0, %s210
      %s225 = sphi 0, %s211
    $region4: #{transformer_pallas.1} parent=1 // loop_header_branch
      %29 = sbr.rel (%p27) target = $region8
    $region5: #{transformer_pallas.1} parent=1 // loop_body
      %s31 = ssub.s32 %s26, 1
      %s32 = ssub.s32 %s26, 2
      %s39 = sadd.s32 1, %s34
      %p40 = scmp.ge.s32.totalorder %s39, 2
      %s41 = scalar_select %p40, 0, %s39
      %s42 = sadd.s32 1, %s33
      %s43 = scalar_select %p40, %s42, %s33
      %p44 = scmp.ge.s32.totalorder %s43, 2
      %s45 = scalar_select %p44, 0, %s43
      %s46 = ssub.s32 %s33, %s45
      %p47 = scmp.eq.s32.totalorder %s46, 0
      %s49 = sadd.s32 %s48, 1
      %s50 = scalar_select %p47, %s48, %s49
      %p53 = pneg %p47
      %p54 = scmp.eq.s32.totalorder %s26, 3
      %p55 = por %p53, %p54
      %p56 = scmp.ne.s32.totalorder %s48, %s51
      %p57 = scmp.eq.s32.totalorder %s26, 0
      %p58 = por %p56, %p57
      %p59 = scmp.ne.s32.totalorder %s48, %s51
      %p60 = scmp.eq.s32.totalorder %s31, 3
      %p61 = por %p59, %p60
      %p62 = scmp.ne.s32.totalorder %s51, %s52
      %p63 = scmp.eq.s32.totalorder %s31, 0
      %p64 = por %p62, %p63
      %p65 = scmp.ne.s32.totalorder %s51, %s52
      %p66 = scmp.eq.s32.totalorder %s32, 3
      %p67 = por %p65, %p66
      %p69 = scmp.ne.s32.totalorder %s52, %s68
      %p70 = scmp.eq.s32.totalorder %s32, 0
      %p71 = por %p69, %p70
      %s72 = ssub.s32 %s33, %s45
      %p73 = scmp.eq.s32.totalorder %s72, 0
      %s75 = sadd.s32 %s74, 1
      %s76 = scalar_select %p73, %s74, %s75
      %p79 = pneg %p73
      %p80 = scmp.eq.s32.totalorder %s26, 3
      %p81 = por %p79, %p80
      %p82 = scmp.ne.s32.totalorder %s74, %s77
      %p83 = scmp.eq.s32.totalorder %s26, 0
      %p84 = por %p82, %p83
      %p85 = scmp.ne.s32.totalorder %s74, %s77
      %p86 = scmp.eq.s32.totalorder %s31, 3
      %p87 = por %p85, %p86
      %p88 = scmp.ne.s32.totalorder %s77, %s78
      %p89 = scmp.eq.s32.totalorder %s31, 0
      %p90 = por %p88, %p89
      %p91 = scmp.ne.s32.totalorder %s77, %s78
      %p92 = scmp.eq.s32.totalorder %s32, 3
      %p93 = por %p91, %p92
      %p95 = scmp.ne.s32.totalorder %s78, %s94
      %p96 = scmp.eq.s32.totalorder %s32, 0
      %p97 = por %p95, %p96
      %s98 = ssub.s32 %s33, %s45
      %p99 = scmp.eq.s32.totalorder %s98, 0
      %s101 = sadd.s32 %s100, 1
      %s102 = scalar_select %p99, %s100, %s101
      %p105 = pneg %p99
      %p106 = scmp.eq.s32.totalorder %s26, 3
      %p107 = por %p105, %p106
      %p108 = scmp.ne.s32.totalorder %s100, %s103
      %p109 = scmp.eq.s32.totalorder %s26, 0
      %p110 = por %p108, %p109
      %p111 = scmp.ne.s32.totalorder %s100, %s103
      %p112 = scmp.eq.s32.totalorder %s31, 3
      %p113 = por %p111, %p112
      %p114 = scmp.ne.s32.totalorder %s103, %s104
      %p115 = scmp.eq.s32.totalorder %s31, 0
      %p116 = por %p114, %p115
      %p117 = scmp.ne.s32.totalorder %s103, %s104
      %p118 = scmp.eq.s32.totalorder %s32, 3
      %p119 = por %p117, %p118
      %p121 = scmp.ne.s32.totalorder %s104, %s120
      %p122 = scmp.eq.s32.totalorder %s32, 0
      %p123 = por %p121, %p122
      %s124 = ssub.s32 %s33, %s45
      %s125 = ssub.s32 %s34, %s41
      %s126 = sor.u32 %s124, %s125
      %p127 = scmp.eq.s32.totalorder %s126, 0
      %s129 = sadd.s32 %s128, 1
      %s130 = scalar_select %p127, %s128, %s129
      %p133 = pneg %p127
      %p134 = scmp.eq.s32.totalorder %s26, 3
      %p135 = por %p133, %p134
      %p136 = scmp.ne.s32.totalorder %s128, %s131
      %p137 = scmp.eq.s32.totalorder %s26, 0
      %p138 = por %p136, %p137
      %p139 = scmp.ne.s32.totalorder %s128, %s131
      %p140 = scmp.eq.s32.totalorder %s31, 3
      %p141 = por %p139, %p140
      %p142 = scmp.ne.s32.totalorder %s131, %s132
      %p143 = scmp.eq.s32.totalorder %s31, 0
      %p144 = por %p142, %p143
      %p145 = scmp.ne.s32.totalorder %s131, %s132
      %p146 = scmp.eq.s32.totalorder %s32, 3
      %p147 = por %p145, %p146
      %p149 = scmp.ne.s32.totalorder %s132, %s148
      %p150 = scmp.eq.s32.totalorder %s32, 0
      %p151 = por %p149, %p150
      %s152 = ssub.s32 %s33, %s45
      %s153 = ssub.s32 %s34, %s41
      %s154 = sor.u32 %s152, %s153
      %p155 = scmp.eq.s32.totalorder %s154, 0
      %s157 = sadd.s32 %s156, 1
      %s158 = scalar_select %p155, %s156, %s157
      %p161 = pneg %p155
      %p162 = scmp.eq.s32.totalorder %s26, 3
      %p163 = por %p161, %p162
      %p164 = scmp.ne.s32.totalorder %s156, %s159
      %p165 = scmp.eq.s32.totalorder %s26, 0
      %p166 = por %p164, %p165
      %p167 = scmp.ne.s32.totalorder %s156, %s159
      %p168 = scmp.eq.s32.totalorder %s31, 3
      %p169 = por %p167, %p168
      %p170 = scmp.ne.s32.totalorder %s159, %s160
      %p171 = scmp.eq.s32.totalorder %s31, 0
      %p172 = por %p170, %p171
      %p173 = scmp.ne.s32.totalorder %s159, %s160
      %p174 = scmp.eq.s32.totalorder %s32, 3
      %p175 = por %p173, %p174
      %p177 = scmp.ne.s32.totalorder %s160, %s176
      %p178 = scmp.eq.s32.totalorder %s32, 0
      %p179 = por %p177, %p178
      %s180 = ssub.s32 %s33, %s45
      %s181 = ssub.s32 %s34, %s41
      %s182 = sor.u32 %s180, %s181
      %p183 = scmp.eq.s32.totalorder %s182, 0
      %s185 = sadd.s32 %s184, 1
      %s186 = scalar_select %p183, %s184, %s185
      %p189 = pneg %p183
      %p190 = scmp.eq.s32.totalorder %s26, 3
      %p191 = por %p189, %p190
      %p192 = scmp.ne.s32.totalorder %s184, %s187
      %p193 = scmp.eq.s32.totalorder %s26, 0
      %p194 = por %p192, %p193
      %p195 = scmp.ne.s32.totalorder %s184, %s187
      %p196 = scmp.eq.s32.totalorder %s31, 3
      %p197 = por %p195, %p196
      %p198 = scmp.ne.s32.totalorder %s187, %s188
      %p199 = scmp.eq.s32.totalorder %s31, 0
      %p200 = por %p198, %p199
      %p201 = scmp.ne.s32.totalorder %s187, %s188
      %p202 = scmp.eq.s32.totalorder %s32, 3
      %p203 = por %p201, %p202
      %p205 = scmp.ne.s32.totalorder %s188, %s204
      %p206 = scmp.eq.s32.totalorder %s32, 0
      %p207 = por %p205, %p206
      %s209 = sadd.s32 %s208, 1
      %p212 = scmp.eq.s32.totalorder %s26, 3
      %p213 = scmp.ne.s32.totalorder %s208, %s210
      %p214 = scmp.eq.s32.totalorder %s26, 0
      %p215 = por %p213, %p214
      %p216 = scmp.ne.s32.totalorder %s208, %s210
      %p217 = scmp.eq.s32.totalorder %s31, 3
      %p218 = por %p216, %p217
      %p219 = scmp.ne.s32.totalorder %s210, %s211
      %p220 = scmp.eq.s32.totalorder %s31, 0
      %p221 = por %p219, %p220
      %p222 = scmp.ne.s32.totalorder %s210, %s211
      %p223 = scmp.eq.s32.totalorder %s32, 3
      %p224 = por %p222, %p223
      %p226 = scmp.ne.s32.totalorder %s211, %s225
      %p227 = scmp.eq.s32.totalorder %s32, 0
      %p228 = por %p226, %p227
      %p229 = scmp.le.s32.totalorder 1, %s26
      %p230 = scmp.lt.s32.totalorder %s26, 5
      %p231 = pnand %p229, %p230
      %p232 = pneg %p231
      // Predicated region
      $region9: #{transformer_pallas.1} parent=5 // pred_check
        _
      $region10: #{transformer_pallas.1} parent=5 // pred_check_branch
        %234 = sbr.rel (%p231) target = $region12
      $region11: #{transformer_pallas.1} parent=5 // pred_region
        %s235 = ssub.s32 %s26, 1
      $region12: #{transformer_pallas.1} parent=5 // pred_fallthru
        _
      %p236 = scmp.lt.s32.totalorder %s26, 4
      // Predicated region
      $region13: #{transformer_pallas.1} parent=5 // pred_check
        %p237 = pneg %p236
      $region14: #{transformer_pallas.1} parent=5 // pred_check_branch
        %239 = sbr.rel (%p237) target = $region16
      $region15: #{transformer_pallas.1} parent=5 // pred_region
        // Predicated region
        $region17: #{transformer_pallas.1} parent=15 // pred_check
          %p240 = pneg %p58
        $region18: #{transformer_pallas.1} parent=15 // pred_check_branch
          %242 = sbr.rel (%p240) target = $region20
        $region19: #{transformer_pallas.1} parent=15 // pred_region
          %s243 = sand.u32 %s48, 1
          %s244 = scalar_lea.sflag [#allocation5], %s243
          %s245 = sand.u32 %s48, 1
          %s246 = smul.addr %s245, 24
          %s247 = scalar_lea.vmem [#allocation4], %s246
          %s249 = ssub.s32 384, 384
          %250 = vsyncadd %s244, %s249
          %s251 = smul.addr %s33, 3
          %s252 = smul.addr %s251, 128
          %s253 = scalar_lea.hbm %s1, %s252
          %s255 = sshll.u32 %s247, 4
          %s256 = int_to_ptr.vmem [resolvable:$true] %s255
          %258 = dma.hbm_to_vmem [thread:$0]  %s253, 384, %s256, %s244
        $region20: #{transformer_pallas.1} parent=15 // pred_fallthru
          _
        // Predicated region
        $region21: #{transformer_pallas.1} parent=15 // pred_check
          %p259 = pneg %p84
        $region22: #{transformer_pallas.1} parent=15 // pred_check_branch
          %261 = sbr.rel (%p259) target = $region24
        $region23: #{transformer_pallas.1} parent=15 // pred_region
          %s262 = sand.u32 %s26, 1
          %s263 = scalar_lea.sflag [#allocation8], %s262
          %s264 = sand.u32 %s74, 1
          %s265 = smul.addr %s264, 192
          %s266 = scalar_lea.vmem [#allocation7], %s265
          %s268 = ssub.s32 3072, 3072
          %269 = vsyncadd %s263, %s268
          %s270 = smul.addr %s33, 48
          %s271 = smul.addr %s270, 64
          %s272 = scalar_lea.hbm %s2, %s271
          %s273 = sshll.u32 %s266, 4
          %s274 = int_to_ptr.vmem [resolvable:$true] %s273
          %279 = dma.hbm_to_vmem [thread:$0]  %s272, 3072, %s274, %s263, 192, 192, 12
        $region24: #{transformer_pallas.1} parent=15 // pred_fallthru
          _
        // Predicated region
        $region25: #{transformer_pallas.1} parent=15 // pred_check
          %p280 = pneg %p110
        $region26: #{transformer_pallas.1} parent=15 // pred_check_branch
          %282 = sbr.rel (%p280) target = $region28
        $region27: #{transformer_pallas.1} parent=15 // pred_region
          %s283 = sand.u32 %s26, 1
          %s284 = scalar_lea.sflag [#allocation8], %s283
          %s285 = sand.u32 %s100, 1
          %s286 = smul.addr %s285, 64
          %s287 = scalar_lea.vmem [#allocation9], %s286
          %s289 = ssub.s32 1024, 1024
          %290 = vsyncadd %s284, %s289
          %s291 = smul.addr %s33, 16
          %s292 = smul.addr %s291, 64
          %s293 = scalar_lea.hbm %s3, %s292
          %s294 = sshll.u32 %s287, 4
          %s295 = int_to_ptr.vmem [resolvable:$true] %s294
          %300 = dma.hbm_to_vmem [thread:$0]  %s293, 1024, %s295, %s284, 64, 64, 4
        $region28: #{transformer_pallas.1} parent=15 // pred_fallthru
          _
        // Predicated region
        $region29: #{transformer_pallas.1} parent=15 // pred_check
          %p301 = pneg %p138
        $region30: #{transformer_pallas.1} parent=15 // pred_check_branch
          %303 = sbr.rel (%p301) target = $region32
        $region31: #{transformer_pallas.1} parent=15 // pred_region
          %s304 = sand.u32 %s26, 1
          %s305 = scalar_lea.sflag [#allocation11], %s304
          %s306 = sand.u32 %s128, 1
          %s307 = smul.addr %s306, 128
          %s308 = scalar_lea.vmem [#allocation10], %s307
          %s309 = smul.u32 2, %s34
          %s311 = ssub.s32 2048, 2048
          %312 = vsyncadd %s305, %s311
          %s313 = smul.addr %s33, 64
          %s314 = sadd.s32 %s309, %s313
          %s315 = smul.addr %s314, 64
          %s316 = scalar_lea.hbm %s4, %s315
          %s317 = sshll.u32 %s308, 4
          %s318 = int_to_ptr.vmem [resolvable:$true] %s317
          %323 = dma.hbm_to_vmem [thread:$0]  %s316, 2048, %s318, %s305, 256, 128, 8
        $region32: #{transformer_pallas.1} parent=15 // pred_fallthru
          _
        // Predicated region
        $region33: #{transformer_pallas.1} parent=15 // pred_check
          %p324 = pneg %p166
        $region34: #{transformer_pallas.1} parent=15 // pred_check_branch
          %326 = sbr.rel (%p324) target = $region36
        $region35: #{transformer_pallas.1} parent=15 // pred_region
          %s327 = sand.u32 %s26, 1
          %s328 = scalar_lea.sflag [#allocation11], %s327
          %s329 = sand.u32 %s156, 1
          %s330 = smul.addr %s329, 2
          %s331 = scalar_lea.vmem [#allocation12], %s330
          %s332 = smul.u32 2, %s34
          %s334 = ssub.s32 32, 32
          %335 = vsyncadd %s328, %s334
          %s336 = smul.addr %s33, 4
          %s337 = sadd.s32 %s332, %s336
          %s338 = smul.addr %s337, 16
          %s339 = scalar_lea.hbm %s5, %s338
          %s341 = sshll.u32 %s331, 4
          %s342 = int_to_ptr.vmem [resolvable:$true] %s341
          %344 = dma.hbm_to_vmem [thread:$0]  %s339, 32, %s342, %s328
        $region36: #{transformer_pallas.1} parent=15 // pred_fallthru
          _
        // Predicated region
        $region37: #{transformer_pallas.1} parent=15 // pred_check
          %p345 = pneg %p194
        $region38: #{transformer_pallas.1} parent=15 // pred_check_branch
          %347 = sbr.rel (%p345) target = $region40
        $region39: #{transformer_pallas.1} parent=15 // pred_region
          %s348 = sand.u32 %s184, 1
          %s349 = scalar_lea.sflag [#allocation14], %s348
          %s350 = sand.u32 %s184, 1
          %s351 = smul.addr %s350, 128
          %s352 = scalar_lea.vmem [#allocation13], %s351
          %s353 = smul.u32 32, %s34
          %s355 = ssub.s32 2048, 2048
          %356 = vsyncadd %s349, %s355
          %s357 = smul.addr %s33, 64
          %s358 = sadd.s32 %s353, %s357
          %s359 = smul.addr %s358, 64
          %s360 = scalar_lea.hbm %s6, %s359
          %s361 = sshll.u32 %s352, 4
          %s362 = int_to_ptr.vmem [resolvable:$true] %s361
          %367 = dma.hbm_to_vmem [thread:$0]  %s360, 2048, %s362, %s349, 64, 64, 4
        $region40: #{transformer_pallas.1} parent=15 // pred_fallthru
          _
      $region16: #{transformer_pallas.1} parent=5 // pred_fallthru
        _
      %p368 = scmp.le.s32.totalorder 1, %s26
      %p369 = scmp.lt.s32.totalorder %s26, 5
      %p370 = pnand %p368, %p369
      %p371 = pneg %p370
      // Predicated region
      $region41: #{transformer_pallas.1} parent=5 // pred_check
        _
      $region42: #{transformer_pallas.1} parent=5 // pred_check_branch
        %373 = sbr.rel (%p370) target = $region44
      $region43: #{transformer_pallas.1} parent=5 // pred_region
        %s374 = ssub.s32 %s26, 1
        %s375 = sand.u32 %s51, 1
        %s376 = scalar_lea.sflag [#allocation5], %s375
        %s377 = sand.u32 %s51, 1
        %s378 = smul.addr %s377, 24
        %s379 = scalar_lea.vmem [#allocation4], %s378
        // Predicated region
        $region45: #{transformer_pallas.1} parent=43 // pred_check
          %p380 = pneg %p64
        $region46: #{transformer_pallas.1} parent=43 // pred_check_branch
          %382 = sbr.rel (%p380) target = $region48
        $region47: #{transformer_pallas.1} parent=43 // pred_region
          %383 = dma.done %s376, 384
        $region48: #{transformer_pallas.1} parent=43 // pred_fallthru
          _
        %s384 = sand.u32 %s31, 1
        %s385 = scalar_lea.sflag [#allocation8], %s384
        %s386 = sand.u32 %s77, 1
        %s387 = smul.addr %s386, 192
        %s388 = scalar_lea.vmem [#allocation7], %s387
        // Predicated region
        $region49: #{transformer_pallas.1} parent=43 // pred_check
          %p389 = pneg %p90
        $region50: #{transformer_pallas.1} parent=43 // pred_check_branch
          %391 = sbr.rel (%p389) target = $region52
        $region51: #{transformer_pallas.1} parent=43 // pred_region
          %392 = dma.done %s385, 3072
        $region52: #{transformer_pallas.1} parent=43 // pred_fallthru
          _
        %s393 = sand.u32 %s31, 1
        %s394 = scalar_lea.sflag [#allocation8], %s393
        %s395 = sand.u32 %s103, 1
        %s396 = smul.addr %s395, 64
        %s397 = scalar_lea.vmem [#allocation9], %s396
        // Predicated region
        $region53: #{transformer_pallas.1} parent=43 // pred_check
          %p398 = pneg %p116
        $region54: #{transformer_pallas.1} parent=43 // pred_check_branch
          %400 = sbr.rel (%p398) target = $region56
        $region55: #{transformer_pallas.1} parent=43 // pred_region
          %401 = dma.done %s394, 1024
        $region56: #{transformer_pallas.1} parent=43 // pred_fallthru
          _
        %s402 = sand.u32 %s31, 1
        %s403 = scalar_lea.sflag [#allocation11], %s402
        %s404 = sand.u32 %s131, 1
        %s405 = smul.addr %s404, 128
        %s406 = scalar_lea.vmem [#allocation10], %s405
        // Predicated region
        $region57: #{transformer_pallas.1} parent=43 // pred_check
          %p407 = pneg %p144
        $region58: #{transformer_pallas.1} parent=43 // pred_check_branch
          %409 = sbr.rel (%p407) target = $region60
        $region59: #{transformer_pallas.1} parent=43 // pred_region
          %410 = dma.done %s403, 2048
        $region60: #{transformer_pallas.1} parent=43 // pred_fallthru
          _
        %s411 = sand.u32 %s31, 1
        %s412 = scalar_lea.sflag [#allocation11], %s411
        %s413 = sand.u32 %s159, 1
        %s414 = smul.addr %s413, 2
        %s415 = scalar_lea.vmem [#allocation12], %s414
        // Predicated region
        $region61: #{transformer_pallas.1} parent=43 // pred_check
          %p416 = pneg %p172
        $region62: #{transformer_pallas.1} parent=43 // pred_check_branch
          %418 = sbr.rel (%p416) target = $region64
        $region63: #{transformer_pallas.1} parent=43 // pred_region
          %419 = dma.done %s412, 32
        $region64: #{transformer_pallas.1} parent=43 // pred_fallthru
          _
        %s420 = sand.u32 %s187, 1
        %s421 = scalar_lea.sflag [#allocation14], %s420
        %s422 = sand.u32 %s187, 1
        %s423 = smul.addr %s422, 128
        %s424 = scalar_lea.vmem [#allocation13], %s423
        // Predicated region
        $region65: #{transformer_pallas.1} parent=43 // pred_check
          %p425 = pneg %p200
        $region66: #{transformer_pallas.1} parent=43 // pred_check_branch
          %427 = sbr.rel (%p425) target = $region68
        $region67: #{transformer_pallas.1} parent=43 // pred_region
          %428 = dma.done %s421, 2048
        $region68: #{transformer_pallas.1} parent=43 // pred_fallthru
          _
        %s429 = sand.u32 %s51, 1
        %s430 = scalar_lea.sflag [#allocation5], %s429
        %s431 = sand.u32 %s51, 1
        %s432 = smul.addr %s431, 24
        %s433 = scalar_lea.vmem [#allocation4], %s432
        %p434 = pneg %p64
        %p435 = pneg %p61
        %s436 = sand.u32 %s31, 1
        %s437 = scalar_lea.sflag [#allocation8], %s436
        %s438 = sand.u32 %s77, 1
        %s439 = smul.addr %s438, 192
        %s440 = scalar_lea.vmem [#allocation7], %s439
        %p441 = pneg %p90
        %p442 = pneg %p87
        %s443 = sand.u32 %s31, 1
        %s444 = scalar_lea.sflag [#allocation8], %s443
        %s445 = sand.u32 %s103, 1
        %s446 = smul.addr %s445, 64
        %s447 = scalar_lea.vmem [#allocation9], %s446
        %p448 = pneg %p116
        %p449 = pneg %p113
        %s450 = sand.u32 %s31, 1
        %s451 = scalar_lea.sflag [#allocation11], %s450
        %s452 = sand.u32 %s131, 1
        %s453 = smul.addr %s452, 128
        %s454 = scalar_lea.vmem [#allocation10], %s453
        %p455 = pneg %p144
        %p456 = pneg %p141
        %s457 = sand.u32 %s31, 1
        %s458 = scalar_lea.sflag [#allocation11], %s457
        %s459 = sand.u32 %s159, 1
        %s460 = smul.addr %s459, 2
        %s461 = scalar_lea.vmem [#allocation12], %s460
        %p462 = pneg %p172
        %p463 = pneg %p169
        %s464 = sand.u32 %s187, 1
        %s465 = scalar_lea.sflag [#allocation14], %s464
        %s466 = sand.u32 %s187, 1
        %s467 = smul.addr %s466, 128
        %s468 = scalar_lea.vmem [#allocation13], %s467
        %p469 = pneg %p200
        %p470 = pneg %p197
        %p471 = pneg %p221
        %p472 = pneg %p218
        %s473 = smul.u32 2, %s36
        %s474 = smul.u32 2, %s36
        %s475 = smul.u32 32, %s36
        %p477 = scmp.eq.s32.totalorder %s35, 0
        %p478 = scmp.eq.s32.totalorder %s36, 0
        %p479 = pnand %p477, %p478
        %p480 = pneg %p479
        // Predicated region
        $region69: #{transformer_pallas.1} parent=43 // pred_check
          _
        $region70: #{transformer_pallas.1} parent=43 // pred_check_branch
          %482 = sbr.rel (%p479) target = $region72
        $region71: #{transformer_pallas.1} parent=43 // pred_region
          $region73: #{transformer_pallas.1} parent=71
            #allocation16 [shape = 's32[1]{0}', space=sflag, size = 0x4, scoped, tag = 'scoped memory for transformer_pallas.1']
            // Predicated region
            $region74: #{transformer_pallas.1} parent=73 // pred_check
              _
            $region75: #{transformer_pallas.1} parent=73 // pred_check_branch
              %484 = sbr.rel target = $region77
            $region76: #{transformer_pallas.1} parent=73 // pred_region
              %485 = sst [smem:[#allocation19]] [#allocation18]
              %486 = sst [smem:[#allocation20]] [#allocation17]
            $region77: #{transformer_pallas.1} parent=73 // pred_fallthru
              _
            %488 = shalt.err (0)
            %s490 = sshll.u32 [#allocation2], 4
            %s491 = int_to_ptr.vmem [resolvable:$true] %s490
            %493 = dma.hbm_to_vmem [thread:$0]  %s0, 512, %s491, [#allocation16]
            %s494 = smul.u32 32, 1
            %s495 = sshll.u32 %s494, 4
            %496 = dma.done [#allocation16], %s495
        $region72: #{transformer_pallas.1} parent=43 // pred_fallthru
          _
        // Predicated region
        $region78: #{transformer_pallas.1} parent=43 // pred_check
          %p497 = pneg %p478
        $region79: #{transformer_pallas.1} parent=43 // pred_check_branch
          %499 = sbr.rel (%p497) target = $region81
        $region80: #{transformer_pallas.1} parent=43 // pred_region
          %v500 = vld [vmem:[%s379] sm:$0xff]
          %v501 = vld [vmem:[%s379 + $0x8] sm:$0xff]
          %v502 = vld [vmem:[%s379 + $0x10] sm:$0xff]
          %v503 = vld [vmem:[#allocation2] sm:$0xff]
          %v504 = vld [vmem:[#allocation2 + $0x8] sm:$0xff]
          %v505 = vld [vmem:[#allocation2 + $0x10] sm:$0xff]
          %v506 = vld [vmem:[#allocation2 + $0x18] sm:$0xff]
          %507 = vadd.xlane.f32.xlu0 %v503
          %v508 = vpop.xlane.xlu0 %507
          %509 = vadd.xlane.f32.xlu0 %v504
          %v510 = vpop.xlane.xlu0 %509
          %v511 = vrcp.pop 128.0
          %v512 = vmul.f32 %v508, %v511
          %v513 = vmul.f32 %v510, %v511
          %v514 = vsub.f32 %v503, %v512
          %v515 = vsub.f32 %v504, %v513
          %v516 = vmul.f32 %v514, %v514
          %v517 = vmul.f32 %v515, %v515
          %518 = vadd.xlane.f32.xlu0 %v516
          %v519 = vpop.xlane.xlu0 %518
          %520 = vadd.xlane.f32.xlu0 %v517
          %v521 = vpop.xlane.xlu0 %520
          %v522 = vmul.f32 %v519, %v511
          %v523 = vmul.f32 %v521, %v511
          %v524 = vadd.f32 %v522, 1e-05
          %v525 = vadd.f32 %v523, 1e-05
          %v526 = vrsqrt.pop %v524
          %v527 = vrsqrt.pop %v525
          %v528 = vmul.f32 %v514, %v526
          %v529 = vmul.f32 %v515, %v527
          %v530 = vlaneseq
          %v531 = vshrl.u32 %v530, 7
          %v532 = vsub.s32 0, %v531
          %v533 = vrot.slane %v500, %v532
          %v534 = vmul.f32 %v528, %v533
          %v535 = vmul.f32 %v529, %v533
          %v536 = vlaneseq
          %v537 = vshrl.u32 %v536, 7
          %v538 = vsub.s32 1, %v537
          %v539 = vrot.slane %v500, %v538
          %v540 = vadd.f32 %v534, %v539
          %v541 = vadd.f32 %v535, %v539
          %v542 = vpack.c.bf16 %v541, %v540
          %v543 = vld [vmem:[%s388] sm:$0xff]
          %v544 = vld [vmem:[%s388 + $0x8] sm:$0xf]
          %v545 = vld [vmem:[%s388 + $0xc] sm:$0xff]
          %v546 = vld [vmem:[%s388 + $0x14] sm:$0xf]
          %v547 = vld [vmem:[%s388 + $0x18] sm:$0xff]
          %v548 = vld [vmem:[%s388 + $0x20] sm:$0xf]
          %v549 = vld [vmem:[%s388 + $0x24] sm:$0xff]
          %v550 = vld [vmem:[%s388 + $0x2c] sm:$0xf]
          %v551 = vld [vmem:[%s388 + $0x30] sm:$0xff]
          %v552 = vld [vmem:[%s388 + $0x38] sm:$0xf]
          %v553 = vld [vmem:[%s388 + $0x3c] sm:$0xff]
          %v554 = vld [vmem:[%s388 + $0x44] sm:$0xf]
          %v555 = vld [vmem:[%s388 + $0x48] sm:$0xff]
          %v556 = vld [vmem:[%s388 + $0x50] sm:$0xf]
          %v557 = vld [vmem:[%s388 + $0x54] sm:$0xff]
          %v558 = vld [vmem:[%s388 + $0x5c] sm:$0xf]
          %v559 = vld [vmem:[%s388 + $0x60] sm:$0xff]
          %v560 = vld [vmem:[%s388 + $0x68] sm:$0xf]
          %v561 = vld [vmem:[%s388 + $0x6c] sm:$0xff]
          %v562 = vld [vmem:[%s388 + $0x74] sm:$0xf]
          %v563 = vld [vmem:[%s388 + $0x78] sm:$0xff]
          %v564 = vld [vmem:[%s388 + $0x80] sm:$0xf]
          %v565 = vld [vmem:[%s388 + $0x84] sm:$0xff]
          %v566 = vld [vmem:[%s388 + $0x8c] sm:$0xf]
          %v567 = vld [vmem:[%s388 + $0x90] sm:$0xff]
          %v568 = vld [vmem:[%s388 + $0x98] sm:$0xf]
          %v569 = vld [vmem:[%s388 + $0x9c] sm:$0xff]
          %v570 = vld [vmem:[%s388 + $0xa4] sm:$0xf]
          %v571 = vld [vmem:[%s388 + $0xa8] sm:$0xff]
          %v572 = vld [vmem:[%s388 + $0xb0] sm:$0xf]
          %v573 = vld [vmem:[%s388 + $0xb4] sm:$0xff]
          %v574 = vld [vmem:[%s388 + $0xbc] sm:$0xf]
          %v575 = vlaneseq
          %v576 = vshrl.u32 %v575, 7
          %v577 = vsub.s32 6, %v576
          %v578 = vrot.slane %v500, %v577
          %v579 = vlaneseq
          %v580 = vshrl.u32 %v579, 7
          %v581 = vsub.s32 6, %v580
          %v582 = vrot.slane %v501, %v581
          %v583 = vlaneseq
          %v584 = vshrl.u32 %v583, 7
          %v585 = vsub.s32 6, %v584
          %v586 = vrot.slane %v502, %v585
          %v619 = vunpack.c.l.b16 %v543
          %v620 = vunpack.c.h.b16 %v543
          %v621 = vunpack.c.l.b16 %v544
          %v622 = vunpack.c.l.b16 %v545
          %v623 = vunpack.c.h.b16 %v545
          %v624 = vunpack.c.l.b16 %v546
          %v625 = vunpack.c.l.b16 %v547
          %v626 = vunpack.c.h.b16 %v547
          %v627 = vunpack.c.l.b16 %v548
          %v628 = vunpack.c.l.b16 %v549
          %v629 = vunpack.c.h.b16 %v549
          %v630 = vunpack.c.l.b16 %v550
          %v631 = vunpack.c.l.b16 %v551
          %v632 = vunpack.c.h.b16 %v551
          %v633 = vunpack.c.l.b16 %v552
          %v634 = vunpack.c.l.b16 %v553
          %v635 = vunpack.c.h.b16 %v553
          %v636 = vunpack.c.l.b16 %v554
          %v637 = vunpack.c.l.b16 %v555
          %v638 = vunpack.c.h.b16 %v555
          %v639 = vunpack.c.l.b16 %v556
          %v640 = vunpack.c.l.b16 %v557
          %v641 = vunpack.c.h.b16 %v557
          %v642 = vunpack.c.l.b16 %v558
          %v643 = vunpack.c.l.b16 %v559
          %v644 = vunpack.c.h.b16 %v559
          %v645 = vunpack.c.l.b16 %v560
          %v646 = vunpack.c.l.b16 %v561
          %v647 = vunpack.c.h.b16 %v561
          %v648 = vunpack.c.l.b16 %v562
          %v649 = vunpack.c.l.b16 %v563
          %v650 = vunpack.c.h.b16 %v563
          %v651 = vunpack.c.l.b16 %v564
          %v652 = vunpack.c.l.b16 %v565
          %v653 = vunpack.c.h.b16 %v565
          %v654 = vunpack.c.l.b16 %v566
          %v655 = vunpack.c.l.b16 %v567
          %v656 = vunpack.c.h.b16 %v567
          %v657 = vunpack.c.l.b16 %v568
          %v658 = vunpack.c.l.b16 %v569
          %v659 = vunpack.c.h.b16 %v569
          %v660 = vunpack.c.l.b16 %v570
          %v661 = vunpack.c.l.b16 %v571
          %v662 = vunpack.c.h.b16 %v571
          %v663 = vunpack.c.l.b16 %v572
          %v664 = vunpack.c.l.b16 %v573
          %v665 = vunpack.c.h.b16 %v573
          %v666 = vunpack.c.l.b16 %v574
          %v667 = vpack.c.b16 %v622, %v619
          %v668 = vpack.c.b16 %v623, %v620
          %v669 = vpack.c.b16 %v624, %v621
          %v670 = vpack.c.b16 %v628, %v625
          %v671 = vpack.c.b16 %v629, %v626
          %v672 = vpack.c.b16 %v630, %v627
          %v673 = vpack.c.b16 %v634, %v631
          %v674 = vpack.c.b16 %v635, %v632
          %v675 = vpack.c.b16 %v636, %v633
          %v676 = vpack.c.b16 %v640, %v637
          %v677 = vpack.c.b16 %v641, %v638
          %v678 = vpack.c.b16 %v642, %v639
          %v679 = vpack.c.b16 %v646, %v643
          %v680 = vpack.c.b16 %v647, %v644
          %v681 = vpack.c.b16 %v648, %v645
          %v682 = vpack.c.b16 %v652, %v649
          %v683 = vpack.c.b16 %v653, %v650
          %v684 = vpack.c.b16 %v654, %v651
          %v685 = vpack.c.b16 %v658, %v655
          %v686 = vpack.c.b16 %v659, %v656
          %v687 = vpack.c.b16 %v660, %v657
          %v688 = vpack.c.b16 %v664, %v661
          %v689 = vpack.c.b16 %v665, %v662
          %v690 = vpack.c.b16 %v666, %v663
          %715 = vmatprep.subr.bf16.mxu0 %v689
          %716 = vmatpush1.bf16.msra.mxu0 %v688
          %717 = vmatprep.subr.bf16.mxu0 %v686
          %718 = vmatpush1.bf16.msra.mxu0 %v685
          %719 = vmatprep.subr.bf16.mxu0 %v683
          %720 = vmatpush1.bf16.msra.mxu0 %v682
          %721 = vmatprep.subr.bf16.mxu0 %v680
          %722 = vmatpush1.bf16.msra.mxu0 %v679
          %723 = vmatprep.subr.bf16.mxu0 %v677
          %724 = vmatpush1.bf16.msra.mxu0 %v676
          %725 = vmatprep.subr.bf16.mxu0 %v674
          %726 = vmatpush1.bf16.msra.mxu0 %v673
          %727 = vmatprep.subr.bf16.mxu0 %v671
          %728 = vmatpush1.bf16.msra.mxu0 %v670
          %729 = vmatprep.subr.bf16.mxu0 %v668
          %730 = vmatpush1.bf16.msra.mxu0 %v667
          %731 = vmatprep.subr.bf16.mxu0 0
          %732 = vmatpush2.bf16.msra.mxu0 0
          %733 = vmatprep.subr.bf16.mxu0 0
          %734 = vmatpush2.bf16.msra.mxu0 0
          %735 = vmatprep.subr.bf16.mxu0 0
          %736 = vmatpush2.bf16.msra.mxu0 0
          %737 = vmatprep.subr.bf16.mxu0 0
          %738 = vmatpush2.bf16.msra.mxu0 0
          %739 = vmatprep.subr.bf16.mxu0 0
          %740 = vmatpush2.bf16.msra.mxu0 0
          %741 = vmatprep.subr.bf16.mxu0 0
          %742 = vmatpush2.bf16.msra.mxu0 0
          %743 = vmatprep.subr.bf16.mxu0 0
          %744 = vmatpush2.bf16.msra.mxu0 0
          %745 = vmatprep.subr.bf16.mxu0 0
          %746 = vmatpush2.bf16.msra.mxu0 0
          %747 = vmatprep.mubr.bf16.mxu0 0
          %748 = vmatmul.mubr.bf16.gmra.mxu0 %v542
          %v749 = vpop.f32.mrf.mxu0
          %v750 = vadd.f32 %v578, %v749
          %v751 = vpop.f32.mrf.mxu0
          %v752 = vadd.f32 %v582, %v751
          %v753 = vpop.f32.mrf.mxu0
          %v754 = vadd.f32 %v578, %v753
          %v755 = vpop.f32.mrf.mxu0
          %v756 = vadd.f32 %v582, %v755
          %757 = vdwg.mxu0
          %758 = vmatprep.subr.bf16.mxu0 0
          %759 = vmatpush1.bf16.msra.mxu0 %v690
          %760 = vmatprep.subr.bf16.mxu0 0
          %761 = vmatpush1.bf16.msra.mxu0 %v687
          %762 = vmatprep.subr.bf16.mxu0 0
          %763 = vmatpush1.bf16.msra.mxu0 %v684
          %764 = vmatprep.subr.bf16.mxu0 0
          %765 = vmatpush1.bf16.msra.mxu0 %v681
          %766 = vmatprep.subr.bf16.mxu0 0
          %767 = vmatpush1.bf16.msra.mxu0 %v678
          %768 = vmatprep.subr.bf16.mxu0 0
          %769 = vmatpush1.bf16.msra.mxu0 %v675
          %770 = vmatprep.subr.bf16.mxu0 0
          %771 = vmatpush1.bf16.msra.mxu0 %v672
          %772 = vmatprep.subr.bf16.mxu0 0
          %773 = vmatpush1.bf16.msra.mxu0 %v669
          %774 = vmatprep.subr.bf16.mxu0 0
          %775 = vmatpush2.bf16.msra.mxu0 0
          %776 = vmatprep.subr.bf16.mxu0 0
          %777 = vmatpush2.bf16.msra.mxu0 0
          %778 = vmatprep.subr.bf16.mxu0 0
          %779 = vmatpush2.bf16.msra.mxu0 0
          %780 = vmatprep.subr.bf16.mxu0 0
          %781 = vmatpush2.bf16.msra.mxu0 0
          %782 = vmatprep.subr.bf16.mxu0 0
          %783 = vmatpush2.bf16.msra.mxu0 0
          %784 = vmatprep.subr.bf16.mxu0 0
          %785 = vmatpush2.bf16.msra.mxu0 0
          %786 = vmatprep.subr.bf16.mxu0 0
          %787 = vmatpush2.bf16.msra.mxu0 0
          %788 = vmatprep.subr.bf16.mxu0 0
          %789 = vmatpush2.bf16.msra.mxu0 0
          %790 = vmatprep.mubr.bf16.mxu0 0
          %791 = vmatmul.mubr.bf16.gmra.mxu0 %v542
          %v792 = vpop.f32.mrf.mxu0
          %v793 = vadd.f32 %v586, %v792
          %v794 = vpop.f32.mrf.mxu0
          %v795 = vpop.f32.mrf.mxu0
          %v796 = vadd.f32 %v586, %v795
          %v797 = vpop.f32.mrf.mxu0
          %798 = vdwg.mxu0
          %v799 = vpack.c.bf16 %v754, %v750
          %v800 = vpack.c.bf16 %v756, %v752
          %v801 = vpack.c.bf16 %v796, %v793
          %v802 = vld [vmem:[%s397] sm:$0xf]
          %v803 = vld [vmem:[%s397 + $0x4] sm:$0xf]
          %v804 = vld [vmem:[%s397 + $0x8] sm:$0xf]
          %v805 = vld [vmem:[%s397 + $0xc] sm:$0xf]
          %v806 = vld [vmem:[%s397 + $0x10] sm:$0xf]
          %v807 = vld [vmem:[%s397 + $0x14] sm:$0xf]
          %v808 = vld [vmem:[%s397 + $0x18] sm:$0xf]
          %v809 = vld [vmem:[%s397 + $0x1c] sm:$0xf]
          %v810 = vld [vmem:[%s397 + $0x20] sm:$0xf]
          %v811 = vld [vmem:[%s397 + $0x24] sm:$0xf]
          %v812 = vld [vmem:[%s397 + $0x28] sm:$0xf]
          %v813 = vld [vmem:[%s397 + $0x2c] sm:$0xf]
          %v814 = vld [vmem:[%s397 + $0x30] sm:$0xf]
          %v815 = vld [vmem:[%s397 + $0x34] sm:$0xf]
          %v816 = vld [vmem:[%s397 + $0x38] sm:$0xf]
          %v817 = vld [vmem:[%s397 + $0x3c] sm:$0xf]
          %vm818 = vcmask 261120
          %v820 = vsel %vm818, %v799, 0
          %v823 = vsel %vm818, %v800, 0
          %825 = vmatprep.subr.bf16.mxu0 0
          %826 = vmatpush1.bf16.xpose.msra.mxu0 0
          %827 = vmatprep.subr.bf16.mxu0 0
          %828 = vmatpush1.bf16.xpose.msra.mxu0 0
          %829 = vmatprep.subr.bf16.mxu0 0
          %830 = vmatpush1.bf16.xpose.msra.mxu0 0
          %831 = vmatprep.subr.bf16.mxu0 0
          %832 = vmatpush1.bf16.xpose.msra.mxu0 0
          %833 = vmatprep.subr.bf16.mxu0 0
          %834 = vmatpush1.bf16.xpose.msra.mxu0 0
          %835 = vmatprep.subr.bf16.mxu0 0
          %836 = vmatpush1.bf16.xpose.msra.mxu0 0
          %837 = vmatprep.subr.bf16.mxu0 0
          %838 = vmatpush1.bf16.xpose.msra.mxu0 0
          %839 = vmatprep.subr.bf16.mxu0 0
          %840 = vmatpush1.bf16.xpose.msra.mxu0 %v823
          %841 = vmatprep.subr.bf16.mxu0 0
          %842 = vmatpush2.bf16.xpose.msra.mxu0 0
          %843 = vmatprep.subr.bf16.mxu0 0
          %844 = vmatpush2.bf16.xpose.msra.mxu0 0
          %845 = vmatprep.subr.bf16.mxu0 0
          %846 = vmatpush2.bf16.xpose.msra.mxu0 0
          %847 = vmatprep.subr.bf16.mxu0 0
          %848 = vmatpush2.bf16.xpose.msra.mxu0 0
          %849 = vmatprep.subr.bf16.mxu0 0
          %850 = vmatpush2.bf16.xpose.msra.mxu0 0
          %851 = vmatprep.subr.bf16.mxu0 0
          %852 = vmatpush2.bf16.xpose.msra.mxu0 0
          %853 = vmatprep.subr.bf16.mxu0 0
          %854 = vmatpush2.bf16.xpose.msra.mxu0 0
          %855 = vmatprep.subr.bf16.mxu0 0
          %856 = vmatpush2.bf16.xpose.msra.mxu0 0
          %857 = vmatprep.mubr.bf16.mxu0 0
          %858 = vmatmul.mubr.bf16.gmra.mxu0 %v820
          %v859 = vpop.f32.mrf.mxu0
          %v860 = vadd.f32 0.0, %v859
          %v861 = vpop.f32.mrf.mxu0
          %v862 = vpop.f32.mrf.mxu0
          %v863 = vadd.f32 0.0, %v862
          %v864 = vpop.f32.mrf.mxu0
          %865 = vdwg.mxu0
          %vm866 = vcmask 130048
          %v867 = vsel %vm866, %v860, -inf
          %868 = vmax.xlane.f32.xlu0 %v867
          %v869 = vpop.xlane.xlu0 %868
          %v870 = vsel %vm866, %v863, -inf
          %871 = vmax.xlane.f32.xlu0 %v870
          %v872 = vpop.xlane.xlu0 %871
          %v873 = vsub.f32 %v860, %v869
          %v874 = vsub.f32 %v863, %v872
          %v875 = vmul.f32 %v873, 1.442695
          %v876 = vpow.pop %v875
          %v877 = vmul.f32 %v874, 1.442695
          %v878 = vpow.pop %v877
          %v879 = vsel %vm866, %v876, 0.0
          %880 = vadd.xlane.f32.xlu0 %v879
          %v881 = vpop.xlane.xlu0 %880
          %v882 = vsel %vm866, %v878, 0.0
          %883 = vadd.xlane.f32.xlu0 %v882
          %v884 = vpop.xlane.xlu0 %883
          %v885 = vrcp.pop %v881
          %v886 = vmul.f32 %v876, %v885
          %v887 = vrcp.pop %v884
          %v888 = vmul.f32 %v878, %v887
          %v889 = vpack.c.bf16 %v888, %v886
          %v891 = vsel %vm866, %v889, 0
          %893 = vmatprep.subr.bf16.mxu0 0
          %894 = vmatpush1.bf16.msra.mxu0 0
          %895 = vmatprep.subr.bf16.mxu0 0
          %896 = vmatpush1.bf16.msra.mxu0 0
          %897 = vmatprep.subr.bf16.mxu0 0
          %898 = vmatpush1.bf16.msra.mxu0 0
          %899 = vmatprep.subr.bf16.mxu0 0
          %900 = vmatpush1.bf16.msra.mxu0 0
          %901 = vmatprep.subr.bf16.mxu0 0
          %902 = vmatpush1.bf16.msra.mxu0 0
          %903 = vmatprep.subr.bf16.mxu0 0
          %904 = vmatpush1.bf16.msra.mxu0 0
          %905 = vmatprep.subr.bf16.mxu0 0
          %906 = vmatpush1.bf16.msra.mxu0 0
          %907 = vmatprep.subr.bf16.mxu0 0
          %908 = vmatpush1.bf16.msra.mxu0 %v801
          %909 = vmatprep.subr.bf16.mxu0 0
          %910 = vmatpush2.bf16.msra.mxu0 0
          %911 = vmatprep.subr.bf16.mxu0 0
          %912 = vmatpush2.bf16.msra.mxu0 0
          %913 = vmatprep.subr.bf16.mxu0 0
          %914 = vmatpush2.bf16.msra.mxu0 0
          %915 = vmatprep.subr.bf16.mxu0 0
          %916 = vmatpush2.bf16.msra.mxu0 0
          %917 = vmatprep.subr.bf16.mxu0 0
          %918 = vmatpush2.bf16.msra.mxu0 0
          %919 = vmatprep.subr.bf16.mxu0 0
          %920 = vmatpush2.bf16.msra.mxu0 0
          %921 = vmatprep.subr.bf16.mxu0 0
          %922 = vmatpush2.bf16.msra.mxu0 0
          %923 = vmatprep.subr.bf16.mxu0 0
          %924 = vmatpush2.bf16.msra.mxu0 0
          %925 = vmatprep.mubr.bf16.mxu0 0
          %926 = vmatmul.mubr.bf16.gmra.mxu0 %v891
          %v927 = vpop.f32.mrf.mxu0
          %v928 = vadd.f32 0.0, %v927
          %v929 = vpop.f32.mrf.mxu0
          %v930 = vpop.f32.mrf.mxu0
          %v931 = vadd.f32 0.0, %v930
          %v932 = vpop.f32.mrf.mxu0
          %933 = vdwg.mxu0
          %v934 = vpack.c.bf16 %v931, %v928
          %v939 = vunpack.c.l.b16 %v802
          %v940 = vunpack.c.l.b16 %v803
          %v941 = vunpack.c.l.b16 %v804
          %v942 = vunpack.c.l.b16 %v805
          %v943 = vpack.c.b16 %v940, %v939
          %v944 = vpack.c.b16 %v942, %v941
          %v948 = vsel %vm818, %v934, 0
          %950 = vmatprep.subr.bf16.mxu0 0
          %951 = vmatpush1.bf16.msra.mxu0 0
          %952 = vmatprep.subr.bf16.mxu0 0
          %953 = vmatpush1.bf16.msra.mxu0 0
          %954 = vmatprep.subr.bf16.mxu0 0
          %955 = vmatpush1.bf16.msra.mxu0 0
          %956 = vmatprep.subr.bf16.mxu0 0
          %957 = vmatpush1.bf16.msra.mxu0 0
          %958 = vmatprep.subr.bf16.mxu0 0
          %959 = vmatpush1.bf16.msra.mxu0 0
          %960 = vmatprep.subr.bf16.mxu0 0
          %961 = vmatpush1.bf16.msra.mxu0 0
          %962 = vmatprep.subr.bf16.mxu0 0
          %963 = vmatpush1.bf16.msra.mxu0 %v944
          %964 = vmatprep.subr.bf16.mxu0 0
          %965 = vmatpush1.bf16.msra.mxu0 %v943
          %966 = vmatprep.subr.bf16.mxu0 0
          %967 = vmatpush2.bf16.msra.mxu0 0
          %968 = vmatprep.subr.bf16.mxu0 0
          %969 = vmatpush2.bf16.msra.mxu0 0
          %970 = vmatprep.subr.bf16.mxu0 0
          %971 = vmatpush2.bf16.msra.mxu0 0
          %972 = vmatprep.subr.bf16.mxu0 0
          %973 = vmatpush2.bf16.msra.mxu0 0
          %974 = vmatprep.subr.bf16.mxu0 0
          %975 = vmatpush2.bf16.msra.mxu0 0
          %976 = vmatprep.subr.bf16.mxu0 0
          %977 = vmatpush2.bf16.msra.mxu0 0
          %978 = vmatprep.subr.bf16.mxu0 0
          %979 = vmatpush2.bf16.msra.mxu0 0
          %980 = vmatprep.subr.bf16.mxu0 0
          %981 = vmatpush2.bf16.msra.mxu0 0
          %982 = vmatprep.mubr.bf16.mxu0 0
          %983 = vmatmul.mubr.bf16.gmra.mxu0 %v948
          %v984 = vpop.f32.mrf.mxu0
          %v985 = vadd.f32 0.0, %v984
          %v986 = vpop.f32.mrf.mxu0
          %v987 = vpop.f32.mrf.mxu0
          %v988 = vadd.f32 0.0, %v987
          %v989 = vpop.f32.mrf.mxu0
          %990 = vdwg.mxu0
          %v991 = vlaneseq
          %v992 = vshrl.u32 %v991, 7
          %v993 = vsub.s32 4, %v992
          %v994 = vrot.slane %v500, %v993
          %v995 = vadd.f32 %v994, %v985
          %v996 = vadd.f32 %v994, %v988
          %998 = vrot.lane.b32.xlu0 %v799, 96
          %v999 = vpop.permute.xlu0 %998
          %1001 = vrot.lane.b32.xlu0 %v800, 96
          %v1002 = vpop.permute.xlu0 %1001
          %v1004 = vsel %vm818, %v999, 0
          %v1007 = vsel %vm818, %v1002, 0
          %1009 = vmatprep.subr.bf16.mxu0 0
          %1010 = vmatpush1.bf16.xpose.msra.mxu0 0
          %1011 = vmatprep.subr.bf16.mxu0 0
          %1012 = vmatpush1.bf16.xpose.msra.mxu0 0
          %1013 = vmatprep.subr.bf16.mxu0 0
          %1014 = vmatpush1.bf16.xpose.msra.mxu0 0
          %1015 = vmatprep.subr.bf16.mxu0 0
          %1016 = vmatpush1.bf16.xpose.msra.mxu0 0
          %1017 = vmatprep.subr.bf16.mxu0 0
          %1018 = vmatpush1.bf16.xpose.msra.mxu0 0
          %1019 = vmatprep.subr.bf16.mxu0 0
          %1020 = vmatpush1.bf16.xpose.msra.mxu0 0
          %1021 = vmatprep.subr.bf16.mxu0 0
          %1022 = vmatpush1.bf16.xpose.msra.mxu0 0
          %1023 = vmatprep.subr.bf16.mxu0 0
          %1024 = vmatpush1.bf16.xpose.msra.mxu0 %v1007
          %1025 = vmatprep.subr.bf16.mxu0 0
          %1026 = vmatpush2.bf16.xpose.msra.mxu0 0
          %1027 = vmatprep.subr.bf16.mxu0 0
          %1028 = vmatpush2.bf16.xpose.msra.mxu0 0
          %1029 = vmatprep.subr.bf16.mxu0 0
          %1030 = vmatpush2.bf16.xpose.msra.mxu0 0
          %1031 = vmatprep.subr.bf16.mxu0 0
          %1032 = vmatpush2.bf16.xpose.msra.mxu0 0
          %1033 = vmatprep.subr.bf16.mxu0 0
          %1034 = vmatpush2.bf16.xpose.msra.mxu0 0
          %1035 = vmatprep.subr.bf16.mxu0 0
          %1036 = vmatpush2.bf16.xpose.msra.mxu0 0
          %1037 = vmatprep.subr.bf16.mxu0 0
          %1038 = vmatpush2.bf16.xpose.msra.mxu0 0
          %1039 = vmatprep.subr.bf16.mxu0 0
          %1040 = vmatpush2.bf16.xpose.msra.mxu0 0
          %1041 = vmatprep.mubr.bf16.mxu0 0
          %1042 = vmatmul.mubr.bf16.gmra.mxu0 %v1004
          %v1043 = vpop.f32.mrf.mxu0
          %v1044 = vadd.f32 0.0, %v1043
          %v1045 = vpop.f32.mrf.mxu0
          %v1046 = vpop.f32.mrf.mxu0
          %v1047 = vadd.f32 0.0, %v1046
          %v1048 = vpop.f32.mrf.mxu0
          %1049 = vdwg.mxu0
          %v1050 = vsel %vm866, %v1044, -inf
          %1051 = vmax.xlane.f32.xlu0 %v1050
          %v1052 = vpop.xlane.xlu0 %1051
          %v1053 = vsel %vm866, %v1047, -inf
          %1054 = vmax.xlane.f32.xlu0 %v1053
          %v1055 = vpop.xlane.xlu0 %1054
          %v1056 = vsub.f32 %v1044, %v1052
          %v1057 = vsub.f32 %v1047, %v1055
          %v1058 = vmul.f32 %v1056, 1.442695
          %v1059 = vpow.pop %v1058
          %v1060 = vmul.f32 %v1057, 1.442695
          %v1061 = vpow.pop %v1060
          %v1062 = vsel %vm866, %v1059, 0.0
          %1063 = vadd.xlane.f32.xlu0 %v1062
          %v1064 = vpop.xlane.xlu0 %1063
          %v1065 = vsel %vm866, %v1061, 0.0
          %1066 = vadd.xlane.f32.xlu0 %v1065
          %v1067 = vpop.xlane.xlu0 %1066
          %v1068 = vrcp.pop %v1064
          %v1069 = vmul.f32 %v1059, %v1068
          %v1070 = vrcp.pop %v1067
          %v1071 = vmul.f32 %v1061, %v1070
          %v1072 = vpack.c.bf16 %v1071, %v1069
          %1074 = vrot.lane.b32.xlu0 %v801, 96
          %v1075 = vpop.permute.xlu0 %1074
          %v1078 = vsel %vm866, %v1072, 0
          %1080 = vmatprep.subr.bf16.mxu0 0
          %1081 = vmatpush1.bf16.msra.mxu0 0
          %1082 = vmatprep.subr.bf16.mxu0 0
          %1083 = vmatpush1.bf16.msra.mxu0 0
          %1084 = vmatprep.subr.bf16.mxu0 0
          %1085 = vmatpush1.bf16.msra.mxu0 0
          %1086 = vmatprep.subr.bf16.mxu0 0
          %1087 = vmatpush1.bf16.msra.mxu0 0
          %1088 = vmatprep.subr.bf16.mxu0 0
          %1089 = vmatpush1.bf16.msra.mxu0 0
          %1090 = vmatprep.subr.bf16.mxu0 0
          %1091 = vmatpush1.bf16.msra.mxu0 0
          %1092 = vmatprep.subr.bf16.mxu0 0
          %1093 = vmatpush1.bf16.msra.mxu0 0
          %1094 = vmatprep.subr.bf16.mxu0 0
          %1095 = vmatpush1.bf16.msra.mxu0 %v1075
          %1096 = vmatprep.subr.bf16.mxu0 0
          %1097 = vmatpush2.bf16.msra.mxu0 0
          %1098 = vmatprep.subr.bf16.mxu0 0
          %1099 = vmatpush2.bf16.msra.mxu0 0
          %1100 = vmatprep.subr.bf16.mxu0 0
          %1101 = vmatpush2.bf16.msra.mxu0 0
          %1102 = vmatprep.subr.bf16.mxu0 0
          %1103 = vmatpush2.bf16.msra.mxu0 0
          %1104 = vmatprep.subr.bf16.mxu0 0
          %1105 = vmatpush2.bf16.msra.mxu0 0
          %1106 = vmatprep.subr.bf16.mxu0 0
          %1107 = vmatpush2.bf16.msra.mxu0 0
          %1108 = vmatprep.subr.bf16.mxu0 0
          %1109 = vmatpush2.bf16.msra.mxu0 0
          %1110 = vmatprep.subr.bf16.mxu0 0
          %1111 = vmatpush2.bf16.msra.mxu0 0
          %1112 = vmatprep.mubr.bf16.mxu0 0
          %1113 = vmatmul.mubr.bf16.gmra.mxu0 %v1078
          %v1114 = vpop.f32.mrf.mxu0
          %v1115 = vadd.f32 0.0, %v1114
          %v1116 = vpop.f32.mrf.mxu0
          %v1117 = vpop.f32.mrf.mxu0
          %v1118 = vadd.f32 0.0, %v1117
          %v1119 = vpop.f32.mrf.mxu0
          %1120 = vdwg.mxu0
          %v1121 = vpack.c.bf16 %v1118, %v1115
          %v1126 = vunpack.c.l.b16 %v806
          %v1127 = vunpack.c.l.b16 %v807
          %v1128 = vunpack.c.l.b16 %v808
          %v1129 = vunpack.c.l.b16 %v809
          %v1130 = vpack.c.b16 %v1127, %v1126
          %v1131 = vpack.c.b16 %v1129, %v1128
          %v1135 = vsel %vm818, %v1121, 0
          %1137 = vmatprep.subr.bf16.mxu0 0
          %1138 = vmatpush1.bf16.msra.mxu0 0
          %1139 = vmatprep.subr.bf16.mxu0 0
          %1140 = vmatpush1.bf16.msra.mxu0 0
          %1141 = vmatprep.subr.bf16.mxu0 0
          %1142 = vmatpush1.bf16.msra.mxu0 0
          %1143 = vmatprep.subr.bf16.mxu0 0
          %1144 = vmatpush1.bf16.msra.mxu0 0
          %1145 = vmatprep.subr.bf16.mxu0 0
          %1146 = vmatpush1.bf16.msra.mxu0 0
          %1147 = vmatprep.subr.bf16.mxu0 0
          %1148 = vmatpush1.bf16.msra.mxu0 0
          %1149 = vmatprep.subr.bf16.mxu0 0
          %1150 = vmatpush1.bf16.msra.mxu0 %v1131
          %1151 = vmatprep.subr.bf16.mxu0 0
          %1152 = vmatpush1.bf16.msra.mxu0 %v1130
          %1153 = vmatprep.subr.bf16.mxu0 0
          %1154 = vmatpush2.bf16.msra.mxu0 0
          %1155 = vmatprep.subr.bf16.mxu0 0
          %1156 = vmatpush2.bf16.msra.mxu0 0
          %1157 = vmatprep.subr.bf16.mxu0 0
          %1158 = vmatpush2.bf16.msra.mxu0 0
          %1159 = vmatprep.subr.bf16.mxu0 0
          %1160 = vmatpush2.bf16.msra.mxu0 0
          %1161 = vmatprep.subr.bf16.mxu0 0
          %1162 = vmatpush2.bf16.msra.mxu0 0
          %1163 = vmatprep.subr.bf16.mxu0 0
          %1164 = vmatpush2.bf16.msra.mxu0 0
          %1165 = vmatprep.subr.bf16.mxu0 0
          %1166 = vmatpush2.bf16.msra.mxu0 0
          %1167 = vmatprep.subr.bf16.mxu0 0
          %1168 = vmatpush2.bf16.msra.mxu0 0
          %1169 = vmatprep.mubr.bf16.mxu0 0
          %1170 = vmatmul.mubr.bf16.gmra.mxu0 %v1135
          %v1171 = vpop.f32.mrf.mxu0
          %v1172 = vadd.f32 0.0, %v1171
          %v1173 = vpop.f32.mrf.mxu0
          %v1174 = vpop.f32.mrf.mxu0
          %v1175 = vadd.f32 0.0, %v1174
          %v1176 = vpop.f32.mrf.mxu0
          %1177 = vdwg.mxu0
          %v1178 = vadd.f32 %v995, %v1172
          %v1179 = vadd.f32 %v996, %v1175
          %1180 = vrot.lane.b32.xlu0 %v799, 64
          %v1181 = vpop.permute.xlu0 %1180
          %1182 = vrot.lane.b32.xlu0 %v800, 64
          %v1183 = vpop.permute.xlu0 %1182
          %v1185 = vsel %vm818, %v1181, 0
          %v1188 = vsel %vm818, %v1183, 0
          %1190 = vmatprep.subr.bf16.mxu0 0
          %1191 = vmatpush1.bf16.xpose.msra.mxu0 0
          %1192 = vmatprep.subr.bf16.mxu0 0
          %1193 = vmatpush1.bf16.xpose.msra.mxu0 0
          %1194 = vmatprep.subr.bf16.mxu0 0
          %1195 = vmatpush1.bf16.xpose.msra.mxu0 0
          %1196 = vmatprep.subr.bf16.mxu0 0
          %1197 = vmatpush1.bf16.xpose.msra.mxu0 0
          %1198 = vmatprep.subr.bf16.mxu0 0
          %1199 = vmatpush1.bf16.xpose.msra.mxu0 0
          %1200 = vmatprep.subr.bf16.mxu0 0
          %1201 = vmatpush1.bf16.xpose.msra.mxu0 0
          %1202 = vmatprep.subr.bf16.mxu0 0
          %1203 = vmatpush1.bf16.xpose.msra.mxu0 0
          %1204 = vmatprep.subr.bf16.mxu0 0
          %1205 = vmatpush1.bf16.xpose.msra.mxu0 %v1188
          %1206 = vmatprep.subr.bf16.mxu0 0
          %1207 = vmatpush2.bf16.xpose.msra.mxu0 0
          %1208 = vmatprep.subr.bf16.mxu0 0
          %1209 = vmatpush2.bf16.xpose.msra.mxu0 0
          %1210 = vmatprep.subr.bf16.mxu0 0
          %1211 = vmatpush2.bf16.xpose.msra.mxu0 0
          %1212 = vmatprep.subr.bf16.mxu0 0
          %1213 = vmatpush2.bf16.xpose.msra.mxu0 0
          %1214 = vmatprep.subr.bf16.mxu0 0
          %1215 = vmatpush2.bf16.xpose.msra.mxu0 0
          %1216 = vmatprep.subr.bf16.mxu0 0
          %1217 = vmatpush2.bf16.xpose.msra.mxu0 0
          %1218 = vmatprep.subr.bf16.mxu0 0
          %1219 = vmatpush2.bf16.xpose.msra.mxu0 0
          %1220 = vmatprep.subr.bf16.mxu0 0
          %1221 = vmatpush2.bf16.xpose.msra.mxu0 0
          %1222 = vmatprep.mubr.bf16.mxu0 0
          %1223 = vmatmul.mubr.bf16.gmra.mxu0 %v1185
          %v1224 = vpop.f32.mrf.mxu0
          %v1225 = vadd.f32 0.0, %v1224
          %v1226 = vpop.f32.mrf.mxu0
          %v1227 = vpop.f32.mrf.mxu0
          %v1228 = vadd.f32 0.0, %v1227
          %v1229 = vpop.f32.mrf.mxu0
          %1230 = vdwg.mxu0
          %v1231 = vsel %vm866, %v1225, -inf
          %1232 = vmax.xlane.f32.xlu0 %v1231
          %v1233 = vpop.xlane.xlu0 %1232
          %v1234 = vsel %vm866, %v1228, -inf
          %1235 = vmax.xlane.f32.xlu0 %v1234
          %v1236 = vpop.xlane.xlu0 %1235
          %v1237 = vsub.f32 %v1225, %v1233
          %v1238 = vsub.f32 %v1228, %v1236
          %v1239 = vmul.f32 %v1237, 1.442695
          %v1240 = vpow.pop %v1239
          %v1241 = vmul.f32 %v1238, 1.442695
          %v1242 = vpow.pop %v1241
          %v1243 = vsel %vm866, %v1240, 0.0
          %1244 = vadd.xlane.f32.xlu0 %v1243
          %v1245 = vpop.xlane.xlu0 %1244
          %v1246 = vsel %vm866, %v1242, 0.0
          %1247 = vadd.xlane.f32.xlu0 %v1246
          %v1248 = vpop.xlane.xlu0 %1247
          %v1249 = vrcp.pop %v1245
          %v1250 = vmul.f32 %v1240, %v1249
          %v1251 = vrcp.pop %v1248
          %v1252 = vmul.f32 %v1242, %v1251
          %v1253 = vpack.c.bf16 %v1252, %v1250
          %1254 = vrot.lane.b32.xlu0 %v801, 64
          %v1255 = vpop.permute.xlu0 %1254
          %v1258 = vsel %vm866, %v1253, 0
          %1260 = vmatprep.subr.bf16.mxu0 0
          %1261 = vmatpush1.bf16.msra.mxu0 0
          %1262 = vmatprep.subr.bf16.mxu0 0
          %1263 = vmatpush1.bf16.msra.mxu0 0
          %1264 = vmatprep.subr.bf16.mxu0 0
          %1265 = vmatpush1.bf16.msra.mxu0 0
          %1266 = vmatprep.subr.bf16.mxu0 0
          %1267 = vmatpush1.bf16.msra.mxu0 0
          %1268 = vmatprep.subr.bf16.mxu0 0
          %1269 = vmatpush1.bf16.msra.mxu0 0
          %1270 = vmatprep.subr.bf16.mxu0 0
          %1271 = vmatpush1.bf16.msra.mxu0 0
          %1272 = vmatprep.subr.bf16.mxu0 0
          %1273 = vmatpush1.bf16.msra.mxu0 0
          %1274 = vmatprep.subr.bf16.mxu0 0
          %1275 = vmatpush1.bf16.msra.mxu0 %v1255
          %1276 = vmatprep.subr.bf16.mxu0 0
          %1277 = vmatpush2.bf16.msra.mxu0 0
          %1278 = vmatprep.subr.bf16.mxu0 0
          %1279 = vmatpush2.bf16.msra.mxu0 0
          %1280 = vmatprep.subr.bf16.mxu0 0
          %1281 = vmatpush2.bf16.msra.mxu0 0
          %1282 = vmatprep.subr.bf16.mxu0 0
          %1283 = vmatpush2.bf16.msra.mxu0 0
          %1284 = vmatprep.subr.bf16.mxu0 0
          %1285 = vmatpush2.bf16.msra.mxu0 0
          %1286 = vmatprep.subr.bf16.mxu0 0
          %1287 = vmatpush2.bf16.msra.mxu0 0
          %1288 = vmatprep.subr.bf16.mxu0 0
          %1289 = vmatpush2.bf16.msra.mxu0 0
          %1290 = vmatprep.subr.bf16.mxu0 0
          %1291 = vmatpush2.bf16.msra.mxu0 0
          %1292 = vmatprep.mubr.bf16.mxu0 0
          %1293 = vmatmul.mubr.bf16.gmra.mxu0 %v1258
          %v1294 = vpop.f32.mrf.mxu0
          %v1295 = vadd.f32 0.0, %v1294
          %v1296 = vpop.f32.mrf.mxu0
          %v1297 = vpop.f32.mrf.mxu0
          %v1298 = vadd.f32 0.0, %v1297
          %v1299 = vpop.f32.mrf.mxu0
          %1300 = vdwg.mxu0
          %v1301 = vpack.c.bf16 %v1298, %v1295
          %v1306 = vunpack.c.l.b16 %v810
          %v1307 = vunpack.c.l.b16 %v811
          %v1308 = vunpack.c.l.b16 %v812
          %v1309 = vunpack.c.l.b16 %v813
          %v1310 = vpack.c.b16 %v1307, %v1306
          %v1311 = vpack.c.b16 %v1309, %v1308
          %v1315 = vsel %vm818, %v1301, 0
          %1317 = vmatprep.subr.bf16.mxu0 0
          %1318 = vmatpush1.bf16.msra.mxu0 0
          %1319 = vmatprep.subr.bf16.mxu0 0
          %1320 = vmatpush1.bf16.msra.mxu0 0
          %1321 = vmatprep.subr.bf16.mxu0 0
          %1322 = vmatpush1.bf16.msra.mxu0 0
          %1323 = vmatprep.subr.bf16.mxu0 0
          %1324 = vmatpush1.bf16.msra.mxu0 0
          %1325 = vmatprep.subr.bf16.mxu0 0
          %1326 = vmatpush1.bf16.msra.mxu0 0
          %1327 = vmatprep.subr.bf16.mxu0 0
          %1328 = vmatpush1.bf16.msra.mxu0 0
          %1329 = vmatprep.subr.bf16.mxu0 0
          %1330 = vmatpush1.bf16.msra.mxu0 %v1311
          %1331 = vmatprep.subr.bf16.mxu0 0
          %1332 = vmatpush1.bf16.msra.mxu0 %v1310
          %1333 = vmatprep.subr.bf16.mxu0 0
          %1334 = vmatpush2.bf16.msra.mxu0 0
          %1335 = vmatprep.subr.bf16.mxu0 0
          %1336 = vmatpush2.bf16.msra.mxu0 0
          %1337 = vmatprep.subr.bf16.mxu0 0
          %1338 = vmatpush2.bf16.msra.mxu0 0
          %1339 = vmatprep.subr.bf16.mxu0 0
          %1340 = vmatpush2.bf16.msra.mxu0 0
          %1341 = vmatprep.subr.bf16.mxu0 0
          %1342 = vmatpush2.bf16.msra.mxu0 0
          %1343 = vmatprep.subr.bf16.mxu0 0
          %1344 = vmatpush2.bf16.msra.mxu0 0
          %1345 = vmatprep.subr.bf16.mxu0 0
          %1346 = vmatpush2.bf16.msra.mxu0 0
          %1347 = vmatprep.subr.bf16.mxu0 0
          %1348 = vmatpush2.bf16.msra.mxu0 0
          %1349 = vmatprep.mubr.bf16.mxu0 0
          %1350 = vmatmul.mubr.bf16.gmra.mxu0 %v1315
          %v1351 = vpop.f32.mrf.mxu0
          %v1352 = vadd.f32 0.0, %v1351
          %v1353 = vpop.f32.mrf.mxu0
          %v1354 = vpop.f32.mrf.mxu0
          %v1355 = vadd.f32 0.0, %v1354
          %v1356 = vpop.f32.mrf.mxu0
          %1357 = vdwg.mxu0
          %v1358 = vadd.f32 %v1178, %v1352
          %v1359 = vadd.f32 %v1179, %v1355
          %1360 = vrot.lane.b32.xlu0 %v799, 32
          %v1361 = vpop.permute.xlu0 %1360
          %1362 = vrot.lane.b32.xlu0 %v800, 32
          %v1363 = vpop.permute.xlu0 %1362
          %v1365 = vsel %vm818, %v1361, 0
          %v1368 = vsel %vm818, %v1363, 0
          %1370 = vmatprep.subr.bf16.mxu0 0
          %1371 = vmatpush1.bf16.xpose.msra.mxu0 0
          %1372 = vmatprep.subr.bf16.mxu0 0
          %1373 = vmatpush1.bf16.xpose.msra.mxu0 0
          %1374 = vmatprep.subr.bf16.mxu0 0
          %1375 = vmatpush1.bf16.xpose.msra.mxu0 0
          %1376 = vmatprep.subr.bf16.mxu0 0
          %1377 = vmatpush1.bf16.xpose.msra.mxu0 0
          %1378 = vmatprep.subr.bf16.mxu0 0
          %1379 = vmatpush1.bf16.xpose.msra.mxu0 0
          %1380 = vmatprep.subr.bf16.mxu0 0
          %1381 = vmatpush1.bf16.xpose.msra.mxu0 0
          %1382 = vmatprep.subr.bf16.mxu0 0
          %1383 = vmatpush1.bf16.xpose.msra.mxu0 0
          %1384 = vmatprep.subr.bf16.mxu0 0
          %1385 = vmatpush1.bf16.xpose.msra.mxu0 %v1368
          %1386 = vmatprep.subr.bf16.mxu0 0
          %1387 = vmatpush2.bf16.xpose.msra.mxu0 0
          %1388 = vmatprep.subr.bf16.mxu0 0
          %1389 = vmatpush2.bf16.xpose.msra.mxu0 0
          %1390 = vmatprep.subr.bf16.mxu0 0
          %1391 = vmatpush2.bf16.xpose.msra.mxu0 0
          %1392 = vmatprep.subr.bf16.mxu0 0
          %1393 = vmatpush2.bf16.xpose.msra.mxu0 0
          %1394 = vmatprep.subr.bf16.mxu0 0
          %1395 = vmatpush2.bf16.xpose.msra.mxu0 0
          %1396 = vmatprep.subr.bf16.mxu0 0
          %1397 = vmatpush2.bf16.xpose.msra.mxu0 0
          %1398 = vmatprep.subr.bf16.mxu0 0
          %1399 = vmatpush2.bf16.xpose.msra.mxu0 0
          %1400 = vmatprep.subr.bf16.mxu0 0
          %1401 = vmatpush2.bf16.xpose.msra.mxu0 0
          %1402 = vmatprep.mubr.bf16.mxu0 0
          %1403 = vmatmul.mubr.bf16.gmra.mxu0 %v1365
          %v1404 = vpop.f32.mrf.mxu0
          %v1405 = vadd.f32 0.0, %v1404
          %v1406 = vpop.f32.mrf.mxu0
          %v1407 = vpop.f32.mrf.mxu0
          %v1408 = vadd.f32 0.0, %v1407
          %v1409 = vpop.f32.mrf.mxu0
          %1410 = vdwg.mxu0
          %v1411 = vsel %vm866, %v1405, -inf
          %1412 = vmax.xlane.f32.xlu0 %v1411
          %v1413 = vpop.xlane.xlu0 %1412
          %v1414 = vsel %vm866, %v1408, -inf
          %1415 = vmax.xlane.f32.xlu0 %v1414
          %v1416 = vpop.xlane.xlu0 %1415
          %v1417 = vsub.f32 %v1405, %v1413
          %v1418 = vsub.f32 %v1408, %v1416
          %v1419 = vmul.f32 %v1417, 1.442695
          %v1420 = vpow.pop %v1419
          %v1421 = vmul.f32 %v1418, 1.442695
          %v1422 = vpow.pop %v1421
          %v1423 = vsel %vm866, %v1420, 0.0
          %1424 = vadd.xlane.f32.xlu0 %v1423
          %v1425 = vpop.xlane.xlu0 %1424
          %v1426 = vsel %vm866, %v1422, 0.0
          %1427 = vadd.xlane.f32.xlu0 %v1426
          %v1428 = vpop.xlane.xlu0 %1427
          %v1429 = vrcp.pop %v1425
          %v1430 = vmul.f32 %v1420, %v1429
          %v1431 = vrcp.pop %v1428
          %v1432 = vmul.f32 %v1422, %v1431
          %v1433 = vpack.c.bf16 %v1432, %v1430
          %1434 = vrot.lane.b32.xlu0 %v801, 32
          %v1435 = vpop.permute.xlu0 %1434
          %v1438 = vsel %vm866, %v1433, 0
          %1440 = vmatprep.subr.bf16.mxu0 0
          %1441 = vmatpush1.bf16.msra.mxu0 0
          %1442 = vmatprep.subr.bf16.mxu0 0
          %1443 = vmatpush1.bf16.msra.mxu0 0
          %1444 = vmatprep.subr.bf16.mxu0 0
          %1445 = vmatpush1.bf16.msra.mxu0 0
          %1446 = vmatprep.subr.bf16.mxu0 0
          %1447 = vmatpush1.bf16.msra.mxu0 0
          %1448 = vmatprep.subr.bf16.mxu0 0
          %1449 = vmatpush1.bf16.msra.mxu0 0
          %1450 = vmatprep.subr.bf16.mxu0 0
          %1451 = vmatpush1.bf16.msra.mxu0 0
          %1452 = vmatprep.subr.bf16.mxu0 0
          %1453 = vmatpush1.bf16.msra.mxu0 0
          %1454 = vmatprep.subr.bf16.mxu0 0
          %1455 = vmatpush1.bf16.msra.mxu0 %v1435
          %1456 = vmatprep.subr.bf16.mxu0 0
          %1457 = vmatpush2.bf16.msra.mxu0 0
          %1458 = vmatprep.subr.bf16.mxu0 0
          %1459 = vmatpush2.bf16.msra.mxu0 0
          %1460 = vmatprep.subr.bf16.mxu0 0
          %1461 = vmatpush2.bf16.msra.mxu0 0
          %1462 = vmatprep.subr.bf16.mxu0 0
          %1463 = vmatpush2.bf16.msra.mxu0 0
          %1464 = vmatprep.subr.bf16.mxu0 0
          %1465 = vmatpush2.bf16.msra.mxu0 0
          %1466 = vmatprep.subr.bf16.mxu0 0
          %1467 = vmatpush2.bf16.msra.mxu0 0
          %1468 = vmatprep.subr.bf16.mxu0 0
          %1469 = vmatpush2.bf16.msra.mxu0 0
          %1470 = vmatprep.subr.bf16.mxu0 0
          %1471 = vmatpush2.bf16.msra.mxu0 0
          %1472 = vmatprep.mubr.bf16.mxu0 0
          %1473 = vmatmul.mubr.bf16.gmra.mxu0 %v1438
          %v1474 = vpop.f32.mrf.mxu0
          %v1475 = vadd.f32 0.0, %v1474
          %v1476 = vpop.f32.mrf.mxu0
          %v1477 = vpop.f32.mrf.mxu0
          %v1478 = vadd.f32 0.0, %v1477
          %v1479 = vpop.f32.mrf.mxu0
          %1480 = vdwg.mxu0
          %v1481 = vpack.c.bf16 %v1478, %v1475
          %v1486 = vunpack.c.l.b16 %v814
          %v1487 = vunpack.c.l.b16 %v815
          %v1488 = vunpack.c.l.b16 %v816
          %v1489 = vunpack.c.l.b16 %v817
          %v1490 = vpack.c.b16 %v1487, %v1486
          %v1491 = vpack.c.b16 %v1489, %v1488
          %v1495 = vsel %vm818, %v1481, 0
          %1497 = vmatprep.subr.bf16.mxu0 0
          %1498 = vmatpush1.bf16.msra.mxu0 0
          %1499 = vmatprep.subr.bf16.mxu0 0
          %1500 = vmatpush1.bf16.msra.mxu0 0
          %1501 = vmatprep.subr.bf16.mxu0 0
          %1502 = vmatpush1.bf16.msra.mxu0 0
          %1503 = vmatprep.subr.bf16.mxu0 0
          %1504 = vmatpush1.bf16.msra.mxu0 0
          %1505 = vmatprep.subr.bf16.mxu0 0
          %1506 = vmatpush1.bf16.msra.mxu0 0
          %1507 = vmatprep.subr.bf16.mxu0 0
          %1508 = vmatpush1.bf16.msra.mxu0 0
          %1509 = vmatprep.subr.bf16.mxu0 0
          %1510 = vmatpush1.bf16.msra.mxu0 %v1491
          %1511 = vmatprep.subr.bf16.mxu0 0
          %1512 = vmatpush1.bf16.msra.mxu0 %v1490
          %1513 = vmatprep.subr.bf16.mxu0 0
          %1514 = vmatpush2.bf16.msra.mxu0 0
          %1515 = vmatprep.subr.bf16.mxu0 0
          %1516 = vmatpush2.bf16.msra.mxu0 0
          %1517 = vmatprep.subr.bf16.mxu0 0
          %1518 = vmatpush2.bf16.msra.mxu0 0
          %1519 = vmatprep.subr.bf16.mxu0 0
          %1520 = vmatpush2.bf16.msra.mxu0 0
          %1521 = vmatprep.subr.bf16.mxu0 0
          %1522 = vmatpush2.bf16.msra.mxu0 0
          %1523 = vmatprep.subr.bf16.mxu0 0
          %1524 = vmatpush2.bf16.msra.mxu0 0
          %1525 = vmatprep.subr.bf16.mxu0 0
          %1526 = vmatpush2.bf16.msra.mxu0 0
          %1527 = vmatprep.subr.bf16.mxu0 0
          %1528 = vmatpush2.bf16.msra.mxu0 0
          %1529 = vmatprep.mubr.bf16.mxu0 0
          %1530 = vmatmul.mubr.bf16.gmra.mxu0 %v1495
          %v1531 = vpop.f32.mrf.mxu0
          %v1532 = vadd.f32 0.0, %v1531
          %v1533 = vpop.f32.mrf.mxu0
          %v1534 = vpop.f32.mrf.mxu0
          %v1535 = vadd.f32 0.0, %v1534
          %v1536 = vpop.f32.mrf.mxu0
          %1537 = vdwg.mxu0
          %v1538 = vadd.f32 %v1358, %v1532
          %v1539 = vadd.f32 %v1359, %v1535
          %v1540 = vadd.f32 %v503, %v1538
          %v1541 = vadd.f32 %v504, %v1539
          %v1542 = vadd.f32 %v505, %v1538
          %v1543 = vadd.f32 %v506, %v1539
          %1544 = vadd.xlane.f32.xlu0 %v1540
          %v1545 = vpop.xlane.xlu0 %1544
          %1546 = vadd.xlane.f32.xlu0 %v1541
          %v1547 = vpop.xlane.xlu0 %1546
          %1548 = vadd.xlane.f32.xlu0 %v1542
          %v1549 = vpop.xlane.xlu0 %1548
          %1550 = vadd.xlane.f32.xlu0 %v1543
          %v1551 = vpop.xlane.xlu0 %1550
          %v1552 = vmul.f32 %v1545, %v511
          %v1553 = vmul.f32 %v1547, %v511
          %v1554 = vmul.f32 %v1549, %v511
          %v1555 = vmul.f32 %v1551, %v511
          %v1556 = vsub.f32 %v1540, %v1552
          %v1557 = vsub.f32 %v1541, %v1553
          %v1558 = vsub.f32 %v1542, %v1554
          %v1559 = vsub.f32 %v1543, %v1555
          %v1560 = vmul.f32 %v1556, %v1556
          %v1561 = vmul.f32 %v1557, %v1557
          %v1562 = vmul.f32 %v1558, %v1558
          %v1563 = vmul.f32 %v1559, %v1559
          %1564 = vadd.xlane.f32.xlu0 %v1560
          %v1565 = vpop.xlane.xlu0 %1564
          %1566 = vadd.xlane.f32.xlu0 %v1561
          %v1567 = vpop.xlane.xlu0 %1566
          %1568 = vadd.xlane.f32.xlu0 %v1562
          %v1569 = vpop.xlane.xlu0 %1568
          %1570 = vadd.xlane.f32.xlu0 %v1563
          %v1571 = vpop.xlane.xlu0 %1570
          %v1572 = vmul.f32 %v1565, %v511
          %v1573 = vmul.f32 %v1567, %v511
          %v1574 = vmul.f32 %v1569, %v511
          %v1575 = vmul.f32 %v1571, %v511
          %v1576 = vadd.f32 %v1572, 1e-05
          %v1577 = vadd.f32 %v1573, 1e-05
          %v1578 = vadd.f32 %v1574, 1e-05
          %v1579 = vadd.f32 %v1575, 1e-05
          %v1580 = vrsqrt.pop %v1576
          %v1581 = vrsqrt.pop %v1577
          %v1582 = vrsqrt.pop %v1578
          %v1583 = vrsqrt.pop %v1579
          %v1584 = vmul.f32 %v1556, %v1580
          %v1585 = vmul.f32 %v1557, %v1581
          %v1586 = vmul.f32 %v1558, %v1582
          %v1587 = vmul.f32 %v1559, %v1583
          %v1588 = vlaneseq
          %v1589 = vshrl.u32 %v1588, 7
          %v1590 = vsub.s32 2, %v1589
          %v1591 = vrot.slane %v500, %v1590
          %v1592 = vmul.f32 %v1584, %v1591
          %v1593 = vmul.f32 %v1585, %v1591
          %v1594 = vmul.f32 %v1586, %v1591
          %v1595 = vmul.f32 %v1587, %v1591
          %v1596 = vlaneseq
          %v1597 = vshrl.u32 %v1596, 7
          %v1598 = vsub.s32 3, %v1597
          %v1599 = vrot.slane %v500, %v1598
          %v1600 = vadd.f32 %v1592, %v1599
          %v1601 = vadd.f32 %v1593, %v1599
          %v1602 = vadd.f32 %v1594, %v1599
          %v1603 = vadd.f32 %v1595, %v1599
          %v1604 = vpack.c.bf16 %v1601, %v1600
          %v1605 = vpack.c.bf16 %v1603, %v1602
          %v1608 = vunpack.c.l.b16 %v1604
          %v1609 = vunpack.c.h.b16 %v1604
          %v1610 = vunpack.c.l.b16 %v1605
          %v1611 = vunpack.c.h.b16 %v1605
          %v1612 = vpack.c.b16 %v1608, %v1608
          %v1613 = vpack.c.b16 %v1609, %v1609
          %v1614 = vpack.c.b16 %v1610, %v1610
          %v1615 = vpack.c.b16 %v1611, %v1611
          %1620 = vst [vmem:[#allocation3] sm:$0xf] %v1612
          %1621 = vst [vmem:[#allocation3 + $0x4] sm:$0xf] %v1613
          %1622 = vst [vmem:[#allocation3 + $0x8] sm:$0xf] %v1614
          %1623 = vst [vmem:[#allocation3 + $0xc] sm:$0xf] %v1615
          %v1624 = vlaneseq
          %v1625 = vshrl.u32 %v1624, 7
          %v1626 = vsub.s32 5, %v1625
          %v1627 = vrot.slane %v500, %v1626
          %v1628 = vadd.f32 %v1540, %v1627
          %v1629 = vadd.f32 %v1541, %v1627
          %v1630 = vadd.f32 %v1542, %v1627
          %v1631 = vadd.f32 %v1543, %v1627
          %1632 = vst [vmem:[#allocation2] sm:$0xff] %v1628
          %1633 = vst [vmem:[#allocation2 + $0x8] sm:$0xff] %v1629
          %1634 = vst [vmem:[#allocation2 + $0x10] sm:$0xff] %v1630
          %1635 = vst [vmem:[#allocation2 + $0x18] sm:$0xff] %v1631
        $region81: #{transformer_pallas.1} parent=43 // pred_fallthru
          _
        %v1636 = vld [vmem:[#allocation3] sm:$0xf]
        %v1637 = vld [vmem:[#allocation3 + $0x4] sm:$0xf]
        %v1638 = vld [vmem:[#allocation3 + $0x8] sm:$0xf]
        %v1639 = vld [vmem:[#allocation3 + $0xc] sm:$0xf]
        %v1640 = vld [vmem:[%s406] sm:$0xff]
        %v1641 = vld [vmem:[%s406 + $0x8] sm:$0xff]
        %v1642 = vld [vmem:[%s406 + $0x10] sm:$0xff]
        %v1643 = vld [vmem:[%s406 + $0x18] sm:$0xff]
        %v1644 = vld [vmem:[%s406 + $0x20] sm:$0xff]
        %v1645 = vld [vmem:[%s406 + $0x28] sm:$0xff]
        %v1646 = vld [vmem:[%s406 + $0x30] sm:$0xff]
        %v1647 = vld [vmem:[%s406 + $0x38] sm:$0xff]
        %v1648 = vld [vmem:[%s406 + $0x40] sm:$0xff]
        %v1649 = vld [vmem:[%s406 + $0x48] sm:$0xff]
        %v1650 = vld [vmem:[%s406 + $0x50] sm:$0xff]
        %v1651 = vld [vmem:[%s406 + $0x58] sm:$0xff]
        %v1652 = vld [vmem:[%s406 + $0x60] sm:$0xff]
        %v1653 = vld [vmem:[%s406 + $0x68] sm:$0xff]
        %v1654 = vld [vmem:[%s406 + $0x70] sm:$0xff]
        %v1655 = vld [vmem:[%s406 + $0x78] sm:$0xff]
        %v1656 = vld [vmem:[%s415] sm:$0x3]
        %v1658 = vlaneseq
        %v1659 = vshrl.u32 %v1658, 7
        %v1660 = vsub.s32 0, %v1659
        %v1661 = vrot.slane %v1656, %v1660
        %v1662 = vlaneseq
        %v1663 = vshrl.u32 %v1662, 7
        %v1664 = vsub.s32 1, %v1663
        %v1665 = vrot.slane %v1656, %v1664
        %v1672 = vunpack.c.l.b16 %v1636
        %v1673 = vunpack.c.l.b16 %v1637
        %v1674 = vunpack.c.l.b16 %v1638
        %v1675 = vunpack.c.l.b16 %v1639
        %v1676 = vpack.c.b16 %v1673, %v1672
        %v1677 = vpack.c.b16 %v1675, %v1674
        %v1696 = vunpack.c.l.b16 %v1640
        %v1697 = vunpack.c.h.b16 %v1640
        %v1698 = vunpack.c.l.b16 %v1641
        %v1699 = vunpack.c.h.b16 %v1641
        %v1700 = vunpack.c.l.b16 %v1642
        %v1701 = vunpack.c.h.b16 %v1642
        %v1702 = vunpack.c.l.b16 %v1643
        %v1703 = vunpack.c.h.b16 %v1643
        %v1704 = vunpack.c.l.b16 %v1644
        %v1705 = vunpack.c.h.b16 %v1644
        %v1706 = vunpack.c.l.b16 %v1645
        %v1707 = vunpack.c.h.b16 %v1645
        %v1708 = vunpack.c.l.b16 %v1646
        %v1709 = vunpack.c.h.b16 %v1646
        %v1710 = vunpack.c.l.b16 %v1647
        %v1711 = vunpack.c.h.b16 %v1647
        %v1712 = vunpack.c.l.b16 %v1648
        %v1713 = vunpack.c.h.b16 %v1648
        %v1714 = vunpack.c.l.b16 %v1649
        %v1715 = vunpack.c.h.b16 %v1649
        %v1716 = vunpack.c.l.b16 %v1650
        %v1717 = vunpack.c.h.b16 %v1650
        %v1718 = vunpack.c.l.b16 %v1651
        %v1719 = vunpack.c.h.b16 %v1651
        %v1720 = vunpack.c.l.b16 %v1652
        %v1721 = vunpack.c.h.b16 %v1652
        %v1722 = vunpack.c.l.b16 %v1653
        %v1723 = vunpack.c.h.b16 %v1653
        %v1724 = vunpack.c.l.b16 %v1654
        %v1725 = vunpack.c.h.b16 %v1654
        %v1726 = vunpack.c.l.b16 %v1655
        %v1727 = vunpack.c.h.b16 %v1655
        %v1728 = vpack.c.b16 %v1698, %v1696
        %v1729 = vpack.c.b16 %v1699, %v1697
        %v1730 = vpack.c.b16 %v1702, %v1700
        %v1731 = vpack.c.b16 %v1703, %v1701
        %v1732 = vpack.c.b16 %v1706, %v1704
        %v1733 = vpack.c.b16 %v1707, %v1705
        %v1734 = vpack.c.b16 %v1710, %v1708
        %v1735 = vpack.c.b16 %v1711, %v1709
        %v1736 = vpack.c.b16 %v1714, %v1712
        %v1737 = vpack.c.b16 %v1715, %v1713
        %v1738 = vpack.c.b16 %v1718, %v1716
        %v1739 = vpack.c.b16 %v1719, %v1717
        %v1740 = vpack.c.b16 %v1722, %v1720
        %v1741 = vpack.c.b16 %v1723, %v1721
        %v1742 = vpack.c.b16 %v1726, %v1724
        %v1743 = vpack.c.b16 %v1727, %v1725
        %1760 = vmatprep.subr.bf16.mxu0 %v1743
        %1761 = vmatpush1.bf16.msra.mxu0 %v1742
        %1762 = vmatprep.subr.bf16.mxu0 %v1741
        %1763 = vmatpush1.bf16.msra.mxu0 %v1740
        %1764 = vmatprep.subr.bf16.mxu0 %v1739
        %1765 = vmatpush1.bf16.msra.mxu0 %v1738
        %1766 = vmatprep.subr.bf16.mxu0 %v1737
        %1767 = vmatpush1.bf16.msra.mxu0 %v1736
        %1768 = vmatprep.subr.bf16.mxu0 %v1735
        %1769 = vmatpush1.bf16.msra.mxu0 %v1734
        %1770 = vmatprep.subr.bf16.mxu0 %v1733
        %1771 = vmatpush1.bf16.msra.mxu0 %v1732
        %1772 = vmatprep.subr.bf16.mxu0 %v1731
        %1773 = vmatpush1.bf16.msra.mxu0 %v1730
        %1774 = vmatprep.subr.bf16.mxu0 %v1729
        %1775 = vmatpush1.bf16.msra.mxu0 %v1728
        %1776 = vmatprep.subr.bf16.mxu0 0
        %1777 = vmatpush2.bf16.msra.mxu0 0
        %1778 = vmatprep.subr.bf16.mxu0 0
        %1779 = vmatpush2.bf16.msra.mxu0 0
        %1780 = vmatprep.subr.bf16.mxu0 0
        %1781 = vmatpush2.bf16.msra.mxu0 0
        %1782 = vmatprep.subr.bf16.mxu0 0
        %1783 = vmatpush2.bf16.msra.mxu0 0
        %1784 = vmatprep.subr.bf16.mxu0 0
        %1785 = vmatpush2.bf16.msra.mxu0 0
        %1786 = vmatprep.subr.bf16.mxu0 0
        %1787 = vmatpush2.bf16.msra.mxu0 0
        %1788 = vmatprep.subr.bf16.mxu0 0
        %1789 = vmatpush2.bf16.msra.mxu0 0
        %1790 = vmatprep.subr.bf16.mxu0 0
        %1791 = vmatpush2.bf16.msra.mxu0 0
        %1792 = vmatprep.mubr.bf16.mxu0 0
        %1793 = vmatmul.mubr.bf16.gmra.mxu0 %v1676
        %v1794 = vpop.f32.mrf.mxu0
        %v1795 = vadd.f32 %v1661, %v1794
        %v1796 = vpop.f32.mrf.mxu0
        %v1797 = vadd.f32 %v1665, %v1796
        %v1798 = vpop.f32.mrf.mxu0
        %v1799 = vadd.f32 %v1661, %v1798
        %v1800 = vpop.f32.mrf.mxu0
        %v1801 = vadd.f32 %v1665, %v1800
        %1802 = vmatprep.mubr.bf16.mxu0 0
        %1803 = vmatmul.mubr.bf16.gmra.mxu0 %v1677
        %v1804 = vpop.f32.mrf.mxu0
        %v1805 = vadd.f32 %v1661, %v1804
        %v1806 = vpop.f32.mrf.mxu0
        %v1807 = vadd.f32 %v1665, %v1806
        %v1808 = vpop.f32.mrf.mxu0
        %v1809 = vadd.f32 %v1661, %v1808
        %v1810 = vpop.f32.mrf.mxu0
        %v1811 = vadd.f32 %v1665, %v1810
        %1812 = vdwg.mxu0
        %v1813 = vmax.f32 %v1795, 0.0
        %v1814 = vmax.f32 %v1797, 0.0
        %v1815 = vmax.f32 %v1799, 0.0
        %v1816 = vmax.f32 %v1801, 0.0
        %v1817 = vmax.f32 %v1805, 0.0
        %v1818 = vmax.f32 %v1807, 0.0
        %v1819 = vmax.f32 %v1809, 0.0
        %v1820 = vmax.f32 %v1811, 0.0
        %v1821 = vld [vmem:[#allocation2] sm:$0xff]
        %v1822 = vld [vmem:[#allocation2 + $0x8] sm:$0xff]
        %v1823 = vld [vmem:[#allocation2 + $0x10] sm:$0xff]
        %v1824 = vld [vmem:[#allocation2 + $0x18] sm:$0xff]
        %v1825 = vpack.c.bf16 %v1815, %v1813
        %v1826 = vpack.c.bf16 %v1816, %v1814
        %v1827 = vpack.c.bf16 %v1819, %v1817
        %v1828 = vpack.c.bf16 %v1820, %v1818
        %v1829 = vld [vmem:[%s424] sm:$0xf]
        %v1830 = vld [vmem:[%s424 + $0x4] sm:$0xf]
        %v1831 = vld [vmem:[%s424 + $0x8] sm:$0xf]
        %v1832 = vld [vmem:[%s424 + $0xc] sm:$0xf]
        %v1833 = vld [vmem:[%s424 + $0x10] sm:$0xf]
        %v1834 = vld [vmem:[%s424 + $0x14] sm:$0xf]
        %v1835 = vld [vmem:[%s424 + $0x18] sm:$0xf]
        %v1836 = vld [vmem:[%s424 + $0x1c] sm:$0xf]
        %v1837 = vld [vmem:[%s424 + $0x20] sm:$0xf]
        %v1838 = vld [vmem:[%s424 + $0x24] sm:$0xf]
        %v1839 = vld [vmem:[%s424 + $0x28] sm:$0xf]
        %v1840 = vld [vmem:[%s424 + $0x2c] sm:$0xf]
        %v1841 = vld [vmem:[%s424 + $0x30] sm:$0xf]
        %v1842 = vld [vmem:[%s424 + $0x34] sm:$0xf]
        %v1843 = vld [vmem:[%s424 + $0x38] sm:$0xf]
        %v1844 = vld [vmem:[%s424 + $0x3c] sm:$0xf]
        %v1845 = vld [vmem:[%s424 + $0x40] sm:$0xf]
        %v1846 = vld [vmem:[%s424 + $0x44] sm:$0xf]
        %v1847 = vld [vmem:[%s424 + $0x48] sm:$0xf]
        %v1848 = vld [vmem:[%s424 + $0x4c] sm:$0xf]
        %v1849 = vld [vmem:[%s424 + $0x50] sm:$0xf]
        %v1850 = vld [vmem:[%s424 + $0x54] sm:$0xf]
        %v1851 = vld [vmem:[%s424 + $0x58] sm:$0xf]
        %v1852 = vld [vmem:[%s424 + $0x5c] sm:$0xf]
        %v1853 = vld [vmem:[%s424 + $0x60] sm:$0xf]
        %v1854 = vld [vmem:[%s424 + $0x64] sm:$0xf]
        %v1855 = vld [vmem:[%s424 + $0x68] sm:$0xf]
        %v1856 = vld [vmem:[%s424 + $0x6c] sm:$0xf]
        %v1857 = vld [vmem:[%s424 + $0x70] sm:$0xf]
        %v1858 = vld [vmem:[%s424 + $0x74] sm:$0xf]
        %v1859 = vld [vmem:[%s424 + $0x78] sm:$0xf]
        %v1860 = vld [vmem:[%s424 + $0x7c] sm:$0xf]
        %v1893 = vunpack.c.l.b16 %v1829
        %v1894 = vunpack.c.l.b16 %v1830
        %v1895 = vunpack.c.l.b16 %v1831
        %v1896 = vunpack.c.l.b16 %v1832
        %v1897 = vunpack.c.l.b16 %v1833
        %v1898 = vunpack.c.l.b16 %v1834
        %v1899 = vunpack.c.l.b16 %v1835
        %v1900 = vunpack.c.l.b16 %v1836
        %v1901 = vunpack.c.l.b16 %v1837
        %v1902 = vunpack.c.l.b16 %v1838
        %v1903 = vunpack.c.l.b16 %v1839
        %v1904 = vunpack.c.l.b16 %v1840
        %v1905 = vunpack.c.l.b16 %v1841
        %v1906 = vunpack.c.l.b16 %v1842
        %v1907 = vunpack.c.l.b16 %v1843
        %v1908 = vunpack.c.l.b16 %v1844
        %v1909 = vunpack.c.l.b16 %v1845
        %v1910 = vunpack.c.l.b16 %v1846
        %v1911 = vunpack.c.l.b16 %v1847
        %v1912 = vunpack.c.l.b16 %v1848
        %v1913 = vunpack.c.l.b16 %v1849
        %v1914 = vunpack.c.l.b16 %v1850
        %v1915 = vunpack.c.l.b16 %v1851
        %v1916 = vunpack.c.l.b16 %v1852
        %v1917 = vunpack.c.l.b16 %v1853
        %v1918 = vunpack.c.l.b16 %v1854
        %v1919 = vunpack.c.l.b16 %v1855
        %v1920 = vunpack.c.l.b16 %v1856
        %v1921 = vunpack.c.l.b16 %v1857
        %v1922 = vunpack.c.l.b16 %v1858
        %v1923 = vunpack.c.l.b16 %v1859
        %v1924 = vunpack.c.l.b16 %v1860
        %v1925 = vpack.c.b16 %v1894, %v1893
        %v1926 = vpack.c.b16 %v1896, %v1895
        %v1927 = vpack.c.b16 %v1898, %v1897
        %v1928 = vpack.c.b16 %v1900, %v1899
        %v1929 = vpack.c.b16 %v1902, %v1901
        %v1930 = vpack.c.b16 %v1904, %v1903
        %v1931 = vpack.c.b16 %v1906, %v1905
        %v1932 = vpack.c.b16 %v1908, %v1907
        %v1933 = vpack.c.b16 %v1910, %v1909
        %v1934 = vpack.c.b16 %v1912, %v1911
        %v1935 = vpack.c.b16 %v1914, %v1913
        %v1936 = vpack.c.b16 %v1916, %v1915
        %v1937 = vpack.c.b16 %v1918, %v1917
        %v1938 = vpack.c.b16 %v1920, %v1919
        %v1939 = vpack.c.b16 %v1922, %v1921
        %v1940 = vpack.c.b16 %v1924, %v1923
        %1957 = vmatprep.subr.bf16.mxu0 0
        %1958 = vmatpush1.bf16.msra.mxu0 %v1932
        %1959 = vmatprep.subr.bf16.mxu0 0
        %1960 = vmatpush1.bf16.msra.mxu0 %v1931
        %1961 = vmatprep.subr.bf16.mxu0 0
        %1962 = vmatpush1.bf16.msra.mxu0 %v1930
        %1963 = vmatprep.subr.bf16.mxu0 0
        %1964 = vmatpush1.bf16.msra.mxu0 %v1929
        %1965 = vmatprep.subr.bf16.mxu0 0
        %1966 = vmatpush1.bf16.msra.mxu0 %v1928
        %1967 = vmatprep.subr.bf16.mxu0 0
        %1968 = vmatpush1.bf16.msra.mxu0 %v1927
        %1969 = vmatprep.subr.bf16.mxu0 0
        %1970 = vmatpush1.bf16.msra.mxu0 %v1926
        %1971 = vmatprep.subr.bf16.mxu0 0
        %1972 = vmatpush1.bf16.msra.mxu0 %v1925
        %1973 = vmatprep.subr.bf16.mxu0 0
        %1974 = vmatpush2.bf16.msra.mxu0 %v1940
        %1975 = vmatprep.subr.bf16.mxu0 0
        %1976 = vmatpush2.bf16.msra.mxu0 %v1939
        %1977 = vmatprep.subr.bf16.mxu0 0
        %1978 = vmatpush2.bf16.msra.mxu0 %v1938
        %1979 = vmatprep.subr.bf16.mxu0 0
        %1980 = vmatpush2.bf16.msra.mxu0 %v1937
        %1981 = vmatprep.subr.bf16.mxu0 0
        %1982 = vmatpush2.bf16.msra.mxu0 %v1936
        %1983 = vmatprep.subr.bf16.mxu0 0
        %1984 = vmatpush2.bf16.msra.mxu0 %v1935
        %1985 = vmatprep.subr.bf16.mxu0 0
        %1986 = vmatpush2.bf16.msra.mxu0 %v1934
        %1987 = vmatprep.subr.bf16.mxu0 0
        %1988 = vmatpush2.bf16.msra.mxu0 %v1933
        %1989 = vmatprep.mubr.bf16.mxu0 %v1826
        %1990 = vmatmul.mubr.bf16.gmra.mxu0 %v1825
        %v1991 = vpop.f32.mrf.mxu0
        %v1992 = vadd.f32 0.0, %v1991
        %v1993 = vpop.f32.mrf.mxu0
        %v1994 = vpop.f32.mrf.mxu0
        %v1995 = vadd.f32 0.0, %v1994
        %v1996 = vpop.f32.mrf.mxu0
        %1997 = vmatprep.mubr.bf16.mxu0 %v1828
        %1998 = vmatmul.mubr.bf16.gmra.mxu0 %v1827
        %v1999 = vpop.f32.mrf.mxu0
        %v2000 = vadd.f32 0.0, %v1999
        %v2001 = vpop.f32.mrf.mxu0
        %v2002 = vpop.f32.mrf.mxu0
        %v2003 = vadd.f32 0.0, %v2002
        %v2004 = vpop.f32.mrf.mxu0
        %2005 = vdwg.mxu0
        %v2006 = vadd.f32 %v1821, %v1992
        %v2007 = vadd.f32 %v1822, %v1995
        %v2008 = vadd.f32 %v1823, %v2000
        %v2009 = vadd.f32 %v1824, %v2003
        %2010 = vst [vmem:[#allocation2] sm:$0xff] %v2006
        %2011 = vst [vmem:[#allocation2 + $0x8] sm:$0xff] %v2007
        %2012 = vst [vmem:[#allocation2 + $0x10] sm:$0xff] %v2008
        %2013 = vst [vmem:[#allocation2 + $0x18] sm:$0xff] %v2009
        %p2014 = scmp.eq.s32.totalorder %s35, 1
        %p2015 = scmp.eq.s32.totalorder %s36, 1
        %p2016 = pnand %p2014, %p2015
        %p2017 = pneg %p2016
        // Predicated region
        $region82: #{transformer_pallas.1} parent=43 // pred_check
          _
        $region83: #{transformer_pallas.1} parent=43 // pred_check_branch
          %2019 = sbr.rel (%p2016) target = $region85
        $region84: #{transformer_pallas.1} parent=43 // pred_region
          %v2020 = vld [vmem:[#allocation2] sm:$0xff]
          %v2021 = vld [vmem:[#allocation2 + $0x8] sm:$0xff]
          %v2022 = vld [vmem:[#allocation2 + $0x10] sm:$0xff]
          %v2023 = vld [vmem:[#allocation2 + $0x18] sm:$0xff]
          %2024 = vst [vmem:[#allocation15] sm:$0xff] %v2020
          %2025 = vst [vmem:[#allocation15 + $0x8] sm:$0xff] %v2021
          %2026 = vst [vmem:[#allocation15 + $0x10] sm:$0xff] %v2022
          %2027 = vst [vmem:[#allocation15 + $0x18] sm:$0xff] %v2023
        $region85: #{transformer_pallas.1} parent=43 // pred_fallthru
          _
        // Predicated region
        $region86: #{transformer_pallas.1} parent=43 // pred_check
          %p2028 = pneg %p218
        $region87: #{transformer_pallas.1} parent=43 // pred_check_branch
          %2030 = sbr.rel (%p2028) target = $region89
        $region88: #{transformer_pallas.1} parent=43 // pred_region
          %s2032 = ssub.s32 512, 512
          %2033 = vsyncadd [#allocation6], %s2032
          %s2034 = sshll.u32 [#allocation15], 4
          %s2035 = int_to_ptr.vmem [resolvable:$true] %s2034
          %2040 = dma.vmem_to_hbm [thread:$0]  %s2035, 512, %s7, [#allocation6], 128, 128, 8
        $region89: #{transformer_pallas.1} parent=43 // pred_fallthru
          _
        // Predicated region
        $region90: #{transformer_pallas.1} parent=43 // pred_check
          %p2041 = pneg %p218
        $region91: #{transformer_pallas.1} parent=43 // pred_check_branch
          %2043 = sbr.rel (%p2041) target = $region93
        $region92: #{transformer_pallas.1} parent=43 // pred_region
          %2044 = dma.done [#allocation6], 512
        $region93: #{transformer_pallas.1} parent=43 // pred_fallthru
          _
      $region44: #{transformer_pallas.1} parent=5 // pred_fallthru
        _
      %p2045 = scmp.le.s32.totalorder 2, %s26
      // Predicated region
      $region94: #{transformer_pallas.1} parent=5 // pred_check
        %p2046 = pneg %p2045
      $region95: #{transformer_pallas.1} parent=5 // pred_check_branch
        %2048 = sbr.rel (%p2046) target = $region97
      $region96: #{transformer_pallas.1} parent=5 // pred_region
        %s2049 = ssub.s32 %s26, 2
      $region97: #{transformer_pallas.1} parent=5 // pred_fallthru
        _
    $region6: #{transformer_pallas.1} parent=1 // loop_footer
      %s30 = sadd.s32 1, %s26
    $region7: #{transformer_pallas.1} parent=1 // loop_footer_branch
      %25 = sbr.rel target = $region3
    $region8: #{transformer_pallas.1} parent=1 // loop_exit
      _
    %2050 = vsyncpa [#allocation5], 1
    %s2051 = scalar_lea.sflag [#allocation5], 1
    %2052 = vsyncpa %s2051, 1
    %2053 = vsyncpa [#allocation8], 1
    %s2054 = scalar_lea.sflag [#allocation8], 1
    %2055 = vsyncpa %s2054, 1
    %2056 = vsyncpa [#allocation11], 1
    %s2057 = scalar_lea.sflag [#allocation11], 1
    %2058 = vsyncpa %s2057, 1
    %2059 = vsyncpa [#allocation14], 1
    %s2060 = scalar_lea.sflag [#allocation14], 1
    %2061 = vsyncpa %s2060, 1
    %2062 = vsyncpa [#allocation6], 1
    %s2063 = scalar_lea.sflag [#allocation6], 1
    %2064 = vsyncpa %s2063, 1

</llo_original>
